<compile_context>
chip_gen: v7x
topology: tpu7x:2x2x1
jax: 0.10.0
libtpu: 0.0.40
codegen_flags: <defaults>
</compile_context>

<pallas_src>
import functools
import math

import jax
import jax.numpy as jnp
import numpy as np
from jax.experimental import pallas as pl
from jax.experimental.pallas import tpu as pltpu


# ----------------------------------------------------------------------------
# Host-side (cached) Sobolev gram construction                     (review #9)
# ----------------------------------------------------------------------------
@functools.lru_cache(maxsize=None)
def _sobolev_gram_np(n):
    """G = Re(F^H diag(k^2) F): z^T G z == sum_k k^2 |DFT_n(z)[k]|^2 (z real)."""
    idx = np.arange(n, dtype=np.float64)
    ang = 2.0 * math.pi * (np.outer(idx, idx) % float(n)) / float(n)
    fr = np.cos(ang)
    fi = -np.sin(ang)
    k = np.concatenate([np.arange(n // 2),
                        np.arange(n // 2, 0, -1)]).astype(np.float64)
    d = (k * k)[:, None]
    g = fr.T @ (d * fr) + fi.T @ (d * fi)
    return np.asarray(g, dtype=np.float32)


# ----------------------------------------------------------------------------
# Kernel
# ----------------------------------------------------------------------------
def _hs_sums_kernel(x_ref, y_ref, gx_ref, gy_ref, o_ref, *, nx, ny, cb, bb):
    """Sobolev-weighted spectral power partial sums for one grid step.

    x_ref, y_ref : (bb, nx, cb*ny) f32  -- bb samples, cb view-channels
                                           (ny contiguous on lanes per channel)
    gx_ref       : (nx, nx) bf16        -- row-DFT Sobolev gram
    gy_ref       : (ny, ny) bf16        -- column-DFT Sobolev gram
    o_ref        : (bb, 128) f32        -- lane0: ||w(X-Y)||^2 partial,
                                           lane1: ||wY||^2 partial
    """
    w = cb * ny
    gx = gx_ref[...]
    gy = gy_ref[...]
    lane = jax.lax.broadcasted_iota(jnp.int32, (1, 128), 1)

    x = x_ref[...]
    y = y_ref[...]
    d = x - y                           # fft(x) - fft(y) == fft(x - y)

    rows = []
    for b in range(bb):                 # static unroll over samples in block
        db = d[b]                       # (nx, w) f32
        yb = y[b]
        db16 = db.astype(jnp.bfloat16)
        yb16 = yb.astype(jnp.bfloat16)

        # -- row-gram term: one fused MXU matmul for both operands (review #1)
        zc = jnp.concatenate([db16, yb16], axis=1)                  # (nx, 2w)
        tx = jnp.dot(gx, zc, preferred_element_type=jnp.float32)    # (nx, 2w)
        num_x = jnp.sum(db * tx[:, :w])
        den_x = jnp.sum(yb * tx[:, w:])

        # -- column-gram term: plain (ny,ny) Gy per contiguous channel block
        #    (kron(Gy, I_ch) eliminated, review #2); operands fused on rows.
        zr = jnp.concatenate([db16, yb16], axis=0)                  # (2nx, w)
        num_y = jnp.float32(0.0)
        den_y = jnp.float32(0.0)
        for c in range(cb):             # short static unroll over channels
            lo, hi = c * ny, (c + 1) * ny
            ty = jnp.dot(zr[:, lo:hi], gy,
                         preferred_element_type=jnp.float32)        # (2nx, ny)
            num_y = num_y + jnp.sum(db[:, lo:hi] * ty[:nx])
            den_y = den_y + jnp.sum(yb[:, lo:hi] * ty[nx:])

        # -- identity (zero-mode) term kept in f32 on the VPU (review #10)
        num_i = jnp.sum(db * db)
        den_i = jnp.sum(yb * yb)

        num = float(ny) * num_x + float(nx) * num_y + float(nx * ny) * num_i
        den = float(ny) * den_x + float(nx) * den_y + float(nx * ny) * den_i
        rows.append(jnp.where(lane == 0, num,
                              jnp.where(lane == 1, den, jnp.float32(0.0))))

    # Lane-dense unmasked (bb, 128) store (review #9 of round 1 kept).
    o_ref[...] = jnp.concatenate(rows, axis=0)


# ----------------------------------------------------------------------------
# Blocking / budget helpers
# ----------------------------------------------------------------------------
def _divisors(n):
    return [d for d in range(1, n + 1) if n % d == 0]


def _pick_channel_block(ch, ny, nx, s):
    """View-channels per grid step: whole channels only; the lane width must
    be the full lane extent or a multiple of 128 (BlockSpec tiling rule)."""
    legal = [d for d in _divisors(ch) if d == ch or (d * ny) % 128 == 0]
    if s < 2:                             # give v7x's 2nd core work (review #6)
        split = [d for d in legal if d < ch]
        if split:
            legal = split
    budget = 2 << 20                      # <= 2 MiB f32 per operand per step
    fitting = [d for d in legal if nx * d * ny * 4 <= budget and d <= 8]
    return max(fitting) if fitting else min(legal)


def _pick_sample_block(s, nx, wl):
    """Samples per grid step: only batch when per-sample work is tiny, to
    amortize the ~0.35us fixed per-step overhead (review #11)."""
    per_sample = nx * wl
    if per_sample >= (1 << 17):
        return 1
    best = 1
    for b in range(1, min(s, 8) + 1):
        if s % b == 0 and b * per_sample <= (1 << 17):
            best = b
    return best


def _round_up(v, m):
    return -(-v // m) * m


def _vmem_estimate(bb, nx, wl, ny):
    """Padded VMEM footprint incl. live f32 intermediates (review #4)."""
    img_blk = bb * _round_up(nx, 8) * _round_up(wl, 128) * 4      # one operand
    gx_b = _round_up(nx, 16) * _round_up(nx, 128) * 2
    gy_b = _round_up(ny, 16) * _round_up(ny, 128) * 2
    out_blk = _round_up(bb, 8) * 128 * 4
    tmp = (2 * img_blk                                             # d + bf16 casts
           + _round_up(nx, 8) * _round_up(2 * wl, 128) * (2 + 4)   # concat + Gx result
           + _round_up(2 * nx, 8) * _round_up(ny, 128) * (2 + 4))  # chan slice + Gy result
    return (2 * 2 * img_blk              # x and y, double-buffered pipeline
            + 2 * (gx_b + gy_b)          # constants, counted double-buffered
            + 2 * out_blk
            + tmp
            + (2 << 20))                 # headroom for Mosaic internal scratch


# ----------------------------------------------------------------------------
# Public wrapper
# ----------------------------------------------------------------------------
def hs_loss(x, y, p=2):
    # TODO(synk): general p-norms (p != 2) have no clean matmul/power form;
    # this kernel implements the module's default p=2 case only.
    if p != 2:
        raise NotImplementedError("Pallas HSLoss kernel supports p=2 only")

    s = int(x.shape[0])
    nx, ny = int(x.shape[-2]), int(x.shape[-1])
    if nx % 2 or ny % 2:
        # The torch k_x/k_y construction also requires even sizes.
        raise ValueError("HSLoss requires even nx and ny")
    total = 1
    for dim in x.shape:
        total *= int(dim)
    ch = total // (s * nx * ny)          # trailing dim of x.view(s, nx, ny, -1)

    # x.view(s, nx, ny, -1) is a free C-order reshape; the single transpose to
    # (s, nx, ch, ny) puts each view-channel's ny contiguous on lanes so the
    # plain (ny, ny) Sobolev gram applies per channel (no kron blowup).  For
    # ch == 1 the transpose is a no-op that XLA elides.
    xv = jnp.reshape(x, (s, nx, ny, ch)).astype(jnp.float32)
    yv = jnp.reshape(y, (s, nx, ny, ch)).astype(jnp.float32)
    xt = jnp.reshape(jnp.transpose(xv, (0, 1, 3, 2)), (s, nx, ch * ny))
    yt = jnp.reshape(jnp.transpose(yv, (0, 1, 3, 2)), (s, nx, ch * ny))

    cb = _pick_channel_block(ch, ny, nx, s)
    wl = cb * ny
    ncb = ch // cb
    bb = _pick_sample_block(s, nx, wl)
    ns = s // bb

    # Cached host-built grams; bf16 feeds the MXU at native rate; the identity
    # term stays out of them (added in f32 inside the kernel).
    gx = jnp.asarray(_sobolev_gram_np(nx), dtype=jnp.bfloat16)
    gy = jnp.asarray(_sobolev_gram_np(ny), dtype=jnp.bfloat16)

    est = _vmem_estimate(bb, nx, wl, ny)
    try:
        cap = int(pltpu.get_tpu_info().vmem_capacity_bytes)
    except Exception:                    # info query only; assume smallest (v7x)
        cap = 64 << 20
    vmem_limit = int(min(max(est, 32 << 20), int(0.85 * cap)))

    kernel = functools.partial(_hs_sums_kernel, nx=nx, ny=ny, cb=cb, bb=bb)

    flops = 4 * s * nx * (ch * ny) * (nx + ny) + 10 * s * nx * ch * ny
    bytes_acc = (2 * s * nx * ch * ny * 4
                 + (nx * nx + ny * ny) * 2
                 + s * ncb * 128 * 4)

    out = pl.pallas_call(
        kernel,
        out_shape=jax.ShapeDtypeStruct((ns, ncb, bb, 128), jnp.float32),
        grid_spec=pltpu.PrefetchScalarGridSpec(
            num_scalar_prefetch=0,
            grid=(ns, ncb),
            in_specs=[
                pl.BlockSpec((bb, nx, wl), lambda i, j: (i, 0, j)),   # x
                pl.BlockSpec((bb, nx, wl), lambda i, j: (i, 0, j)),   # y
                pl.BlockSpec((nx, nx), lambda i, j: (0, 0)),          # Gx
                pl.BlockSpec((ny, ny), lambda i, j: (0, 0)),          # Gy
            ],
            out_specs=pl.BlockSpec((None, None, bb, 128),
                                   lambda i, j: (i, j, 0, 0)),
        ),
        compiler_params=pltpu.CompilerParams(
            dimension_semantics=("parallel", "parallel"),
            vmem_limit_bytes=vmem_limit,
        ),
        cost_estimate=pl.CostEstimate(flops=flops, transcendentals=0,
                                      bytes_accessed=bytes_acc),
    )(xt, yt, gx, gy)

    # Combine channel-block partial sums, then finish the norm ratio in f32.
    sums = jnp.reshape(jnp.sum(out, axis=1), (s, 128))
    ratios = jnp.sqrt(sums[:, 0] / sums[:, 1])
    return jnp.mean(ratios)


# ----------------------------------------------------------------------------
# Pure-JAX reference (direct transcription of the PyTorch forward)
# ----------------------------------------------------------------------------
def hs_loss_ref(x, y, p=2):
    s = x.shape[0]
    nx, ny = x.shape[-2], x.shape[-1]
    x = jnp.reshape(x, (s, nx, ny, -1)).astype(jnp.float32)
    y = jnp.reshape(y, (s, nx, ny, -1)).astype(jnp.float32)
    k_x = jnp.concatenate([jnp.arange(nx // 2), jnp.arange(nx // 2, 0, -1)])
    k_x = jnp.tile(k_x.reshape(nx, 1), (1, ny)).reshape(1, nx, ny, 1)
    k_y = jnp.concatenate([jnp.arange(ny // 2), jnp.arange(ny // 2, 0, -1)])
    k_y = jnp.tile(k_y.reshape(1, ny), (nx, 1)).reshape(1, nx, ny, 1)
    xf = jnp.fft.fftn(x, axes=[1, 2])
    yf = jnp.fft.fftn(y, axes=[1, 2])
    w = jnp.sqrt(1.0 + k_x.astype(jnp.float32) ** 2 + k_y.astype(jnp.float32) ** 2)
    dx = (w * xf - w * yf).reshape(s, -1)
    yy = (w * yf).reshape(s, -1)
    diff_norms = jnp.linalg.norm(dx, ord=p, axis=1)
    y_norms = jnp.linalg.norm(yy, ord=p, axis=1)
    return jnp.mean(diff_norms / y_norms)


if __name__ == "__main__":
    key = jax.random.PRNGKey(0)
    k1, k2 = jax.random.split(key)
    x = jax.random.normal(k1, (2, 4, 16, 16), dtype=jnp.float32)  # NCHW
    y = jax.random.normal(k2, (2, 4, 16, 16), dtype=jnp.float32)  # NCHW

    out = jax.block_until_ready(hs_loss(x, y))
    ref = jax.block_until_ready(hs_loss_ref(x, y))

    assert jnp.isfinite(out), "kernel produced non-finite output"
    assert jnp.allclose(out, ref, rtol=2e-2, atol=1e-4), (out, ref)

    print("KERNEL_OK")
</pallas_src>

<mosaic_0001>
module attributes {stable_mosaic.version = 11 : i64} {
  func.func @_hs_sums_kernel(%arg0: i32, %arg1: i32, %arg2: memref<2x16x64xf32, #tpu.memory_space<vmem>>, %arg3: memref<2x16x64xf32, #tpu.memory_space<vmem>>, %arg4: memref<16x16xbf16, #tpu.memory_space<vmem>>, %arg5: memref<16x16xbf16, #tpu.memory_space<vmem>>, %arg6: memref<1x1x2x128xf32, #tpu.memory_space<vmem>>) attributes {dimension_semantics = [#tpu.dimension_semantics<parallel>, #tpu.dimension_semantics<parallel>], iteration_bounds = array<i64: 1, 1>, scalar_prefetch = 0 : i64, scratch_operands = 0 : i64, tpu.core_type = #tpu.core_type<tc>, window_params = [{transform_indices = @transform_0, window_bounds = array<i64: 2, 16, 64>}, {transform_indices = @transform_1, window_bounds = array<i64: 2, 16, 64>}, {pipeline_mode = #tpu.pipeline_mode<synchronous>, transform_indices = @transform_2, window_bounds = array<i64: 16, 16>}, {pipeline_mode = #tpu.pipeline_mode<synchronous>, transform_indices = @transform_3, window_bounds = array<i64: 16, 16>}, {transform_indices = @transform_4, window_bounds = array<i64: 1, 1, 2, 128>}]} {
    %c0 = arith.constant 0 : index
    %c0_0 = arith.constant 0 : index
    %0 = vector.load %arg4[%c0, %c0_0] : memref<16x16xbf16, #tpu.memory_space<vmem>>, vector<16x16xbf16>
    %c0_1 = arith.constant 0 : index
    %c0_2 = arith.constant 0 : index
    %1 = vector.load %arg5[%c0_1, %c0_2] : memref<16x16xbf16, #tpu.memory_space<vmem>>, vector<16x16xbf16>
    %2 = tpu.iota {dimensions = array<i32: 1>} : vector<1x128xi32>
    %c0_3 = arith.constant 0 : index
    %c0_4 = arith.constant 0 : index
    %c0_5 = arith.constant 0 : index
    %3 = vector.load %arg2[%c0_3, %c0_4, %c0_5] : memref<2x16x64xf32, #tpu.memory_space<vmem>>, vector<2x16x64xf32>
    %c0_6 = arith.constant 0 : index
    %c0_7 = arith.constant 0 : index
    %c0_8 = arith.constant 0 : index
    %4 = vector.load %arg3[%c0_6, %c0_7, %c0_8] : memref<2x16x64xf32, #tpu.memory_space<vmem>>, vector<2x16x64xf32>
    %5 = arith.subf %3, %4 : vector<2x16x64xf32>
    %6 = vector.extract_strided_slice %5 {offsets = [0, 0, 0], sizes = [1, 16, 64], strides = [1, 1, 1]} : vector<2x16x64xf32> to vector<1x16x64xf32>
    %7 = vector.shape_cast %6 : vector<1x16x64xf32> to vector<16x64xf32>
    %8 = vector.extract_strided_slice %4 {offsets = [0, 0, 0], sizes = [1, 16, 64], strides = [1, 1, 1]} : vector<2x16x64xf32> to vector<1x16x64xf32>
    %9 = vector.shape_cast %8 : vector<1x16x64xf32> to vector<16x64xf32>
    %10 = arith.truncf %7 : vector<16x64xf32> to vector<16x64xbf16>
    %11 = arith.truncf %9 : vector<16x64xf32> to vector<16x64xbf16>
    %12 = tpu.concatenate %10, %11 in 1 : vector<16x64xbf16>, vector<16x64xbf16> -> vector<16x128xbf16>
    %cst = arith.constant dense<0.000000e+00> : vector<16x128xf32>
    %13 = tpu.matmul %0, %12, %cst {dimension_numbers = #tpu.dot_dimension_numbers<[1], [0], [0], [1], [0, 0, 1, 1], [], []>} : vector<16x16xbf16>, vector<16x128xbf16>, vector<16x128xf32> -> vector<16x128xf32>
    %14 = vector.extract_strided_slice %13 {offsets = [0, 0], sizes = [16, 64], strides = [1, 1]} : vector<16x128xf32> to vector<16x64xf32>
    %15 = arith.mulf %7, %14 : vector<16x64xf32>
    %16 = vector.shape_cast %15 : vector<16x64xf32> to vector<1x16x64xf32>
    %cst_9 = arith.constant dense<0.000000e+00> : vector<1xf32>
    %17 = vector.multi_reduction <add>, %16, %cst_9 [1, 2] : vector<1x16x64xf32> to vector<1xf32>
    %18 = vector.shape_cast %17 : vector<1xf32> to vector<1x1x1xf32>
    %19 = vector.extract %18[0, 0, 0] : f32 from vector<1x1x1xf32>
    %20 = vector.extract_strided_slice %13 {offsets = [0, 64], sizes = [16, 64], strides = [1, 1]} : vector<16x128xf32> to vector<16x64xf32>
    %21 = arith.mulf %9, %20 : vector<16x64xf32>
    %22 = vector.shape_cast %21 : vector<16x64xf32> to vector<1x16x64xf32>
    %cst_10 = arith.constant dense<0.000000e+00> : vector<1xf32>
    %23 = vector.multi_reduction <add>, %22, %cst_10 [1, 2] : vector<1x16x64xf32> to vector<1xf32>
    %24 = vector.shape_cast %23 : vector<1xf32> to vector<1x1x1xf32>
    %25 = vector.extract %24[0, 0, 0] : f32 from vector<1x1x1xf32>
    %26 = tpu.concatenate %10, %11 in 0 : vector<16x64xbf16>, vector<16x64xbf16> -> vector<32x64xbf16>
    %27 = vector.extract_strided_slice %26 {offsets = [0, 0], sizes = [32, 16], strides = [1, 1]} : vector<32x64xbf16> to vector<32x16xbf16>
    %cst_11 = arith.constant dense<0.000000e+00> : vector<32x16xf32>
    %28 = tpu.matmul %27, %1, %cst_11 {dimension_numbers = #tpu.dot_dimension_numbers<[1], [0], [0], [1], [0, 0, 1, 1], [], []>} : vector<32x16xbf16>, vector<16x16xbf16>, vector<32x16xf32> -> vector<32x16xf32>
    %29 = vector.extract_strided_slice %7 {offsets = [0, 0], sizes = [16, 16], strides = [1, 1]} : vector<16x64xf32> to vector<16x16xf32>
    %30 = vector.extract_strided_slice %28 {offsets = [0, 0], sizes = [16, 16], strides = [1, 1]} : vector<32x16xf32> to vector<16x16xf32>
    %31 = arith.mulf %29, %30 : vector<16x16xf32>
    %32 = vector.shape_cast %31 : vector<16x16xf32> to vector<1x16x16xf32>
    %cst_12 = arith.constant dense<0.000000e+00> : vector<1xf32>
    %33 = vector.multi_reduction <add>, %32, %cst_12 [1, 2] : vector<1x16x16xf32> to vector<1xf32>
    %34 = vector.shape_cast %33 : vector<1xf32> to vector<1x1x1xf32>
    %35 = vector.extract %34[0, 0, 0] : f32 from vector<1x1x1xf32>
    %cst_13 = arith.constant 0.000000e+00 : f32
    %36 = arith.addf %cst_13, %35 : f32
    %37 = vector.extract_strided_slice %9 {offsets = [0, 0], sizes = [16, 16], strides = [1, 1]} : vector<16x64xf32> to vector<16x16xf32>
    %38 = vector.extract_strided_slice %28 {offsets = [16, 0], sizes = [16, 16], strides = [1, 1]} : vector<32x16xf32> to vector<16x16xf32>
    %39 = arith.mulf %37, %38 : vector<16x16xf32>
    %40 = vector.shape_cast %39 : vector<16x16xf32> to vector<1x16x16xf32>
    %cst_14 = arith.constant dense<0.000000e+00> : vector<1xf32>
    %41 = vector.multi_reduction <add>, %40, %cst_14 [1, 2] : vector<1x16x16xf32> to vector<1xf32>
    %42 = vector.shape_cast %41 : vector<1xf32> to vector<1x1x1xf32>
    %43 = vector.extract %42[0, 0, 0] : f32 from vector<1x1x1xf32>
    %cst_15 = arith.constant 0.000000e+00 : f32
    %44 = arith.addf %cst_15, %43 : f32
    %45 = vector.extract_strided_slice %26 {offsets = [0, 16], sizes = [32, 16], strides = [1, 1]} : vector<32x64xbf16> to vector<32x16xbf16>
    %cst_16 = arith.constant dense<0.000000e+00> : vector<32x16xf32>
    %46 = tpu.matmul %45, %1, %cst_16 {dimension_numbers = #tpu.dot_dimension_numbers<[1], [0], [0], [1], [0, 0, 1, 1], [], []>} : vector<32x16xbf16>, vector<16x16xbf16>, vector<32x16xf32> -> vector<32x16xf32>
    %47 = vector.extract_strided_slice %7 {offsets = [0, 16], sizes = [16, 16], strides = [1, 1]} : vector<16x64xf32> to vector<16x16xf32>
    %48 = vector.extract_strided_slice %46 {offsets = [0, 0], sizes = [16, 16], strides = [1, 1]} : vector<32x16xf32> to vector<16x16xf32>
    %49 = arith.mulf %47, %48 : vector<16x16xf32>
    %50 = vector.shape_cast %49 : vector<16x16xf32> to vector<1x16x16xf32>
    %cst_17 = arith.constant dense<0.000000e+00> : vector<1xf32>
    %51 = vector.multi_reduction <add>, %50, %cst_17 [1, 2] : vector<1x16x16xf32> to vector<1xf32>
    %52 = vector.shape_cast %51 : vector<1xf32> to vector<1x1x1xf32>
    %53 = vector.extract %52[0, 0, 0] : f32 from vector<1x1x1xf32>
    %54 = arith.addf %36, %53 : f32
    %55 = vector.extract_strided_slice %9 {offsets = [0, 16], sizes = [16, 16], strides = [1, 1]} : vector<16x64xf32> to vector<16x16xf32>
    %56 = vector.extract_strided_slice %46 {offsets = [16, 0], sizes = [16, 16], strides = [1, 1]} : vector<32x16xf32> to vector<16x16xf32>
    %57 = arith.mulf %55, %56 : vector<16x16xf32>
    %58 = vector.shape_cast %57 : vector<16x16xf32> to vector<1x16x16xf32>
    %cst_18 = arith.constant dense<0.000000e+00> : vector<1xf32>
    %59 = vector.multi_reduction <add>, %58, %cst_18 [1, 2] : vector<1x16x16xf32> to vector<1xf32>
    %60 = vector.shape_cast %59 : vector<1xf32> to vector<1x1x1xf32>
    %61 = vector.extract %60[0, 0, 0] : f32 from vector<1x1x1xf32>
    %62 = arith.addf %44, %61 : f32
    %63 = vector.extract_strided_slice %26 {offsets = [0, 32], sizes = [32, 16], strides = [1, 1]} : vector<32x64xbf16> to vector<32x16xbf16>
    %cst_19 = arith.constant dense<0.000000e+00> : vector<32x16xf32>
    %64 = tpu.matmul %63, %1, %cst_19 {dimension_numbers = #tpu.dot_dimension_numbers<[1], [0], [0], [1], [0, 0, 1, 1], [], []>} : vector<32x16xbf16>, vector<16x16xbf16>, vector<32x16xf32> -> vector<32x16xf32>
    %65 = vector.extract_strided_slice %7 {offsets = [0, 32], sizes = [16, 16], strides = [1, 1]} : vector<16x64xf32> to vector<16x16xf32>
    %66 = vector.extract_strided_slice %64 {offsets = [0, 0], sizes = [16, 16], strides = [1, 1]} : vector<32x16xf32> to vector<16x16xf32>
    %67 = arith.mulf %65, %66 : vector<16x16xf32>
    %68 = vector.shape_cast %67 : vector<16x16xf32> to vector<1x16x16xf32>
    %cst_20 = arith.constant dense<0.000000e+00> : vector<1xf32>
    %69 = vector.multi_reduction <add>, %68, %cst_20 [1, 2] : vector<1x16x16xf32> to vector<1xf32>
    %70 = vector.shape_cast %69 : vector<1xf32> to vector<1x1x1xf32>
    %71 = vector.extract %70[0, 0, 0] : f32 from vector<1x1x1xf32>
    %72 = arith.addf %54, %71 : f32
    %73 = vector.extract_strided_slice %9 {offsets = [0, 32], sizes = [16, 16], strides = [1, 1]} : vector<16x64xf32> to vector<16x16xf32>
    %74 = vector.extract_strided_slice %64 {offsets = [16, 0], sizes = [16, 16], strides = [1, 1]} : vector<32x16xf32> to vector<16x16xf32>
    %75 = arith.mulf %73, %74 : vector<16x16xf32>
    %76 = vector.shape_cast %75 : vector<16x16xf32> to vector<1x16x16xf32>
    %cst_21 = arith.constant dense<0.000000e+00> : vector<1xf32>
    %77 = vector.multi_reduction <add>, %76, %cst_21 [1, 2] : vector<1x16x16xf32> to vector<1xf32>
    %78 = vector.shape_cast %77 : vector<1xf32> to vector<1x1x1xf32>
    %79 = vector.extract %78[0, 0, 0] : f32 from vector<1x1x1xf32>
    %80 = arith.addf %62, %79 : f32
    %81 = vector.extract_strided_slice %26 {offsets = [0, 48], sizes = [32, 16], strides = [1, 1]} : vector<32x64xbf16> to vector<32x16xbf16>
    %cst_22 = arith.constant dense<0.000000e+00> : vector<32x16xf32>
    %82 = tpu.matmul %81, %1, %cst_22 {dimension_numbers = #tpu.dot_dimension_numbers<[1], [0], [0], [1], [0, 0, 1, 1], [], []>} : vector<32x16xbf16>, vector<16x16xbf16>, vector<32x16xf32> -> vector<32x16xf32>
    %83 = vector.extract_strided_slice %7 {offsets = [0, 48], sizes = [16, 16], strides = [1, 1]} : vector<16x64xf32> to vector<16x16xf32>
    %84 = vector.extract_strided_slice %82 {offsets = [0, 0], sizes = [16, 16], strides = [1, 1]} : vector<32x16xf32> to vector<16x16xf32>
    %85 = arith.mulf %83, %84 : vector<16x16xf32>
    %86 = vector.shape_cast %85 : vector<16x16xf32> to vector<1x16x16xf32>
    %cst_23 = arith.constant dense<0.000000e+00> : vector<1xf32>
    %87 = vector.multi_reduction <add>, %86, %cst_23 [1, 2] : vector<1x16x16xf32> to vector<1xf32>
    %88 = vector.shape_cast %87 : vector<1xf32> to vector<1x1x1xf32>
    %89 = vector.extract %88[0, 0, 0] : f32 from vector<1x1x1xf32>
    %90 = arith.addf %72, %89 : f32
    %91 = vector.extract_strided_slice %9 {offsets = [0, 48], sizes = [16, 16], strides = [1, 1]} : vector<16x64xf32> to vector<16x16xf32>
    %92 = vector.extract_strided_slice %82 {offsets = [16, 0], sizes = [16, 16], strides = [1, 1]} : vector<32x16xf32> to vector<16x16xf32>
    %93 = arith.mulf %91, %92 : vector<16x16xf32>
    %94 = vector.shape_cast %93 : vector<16x16xf32> to vector<1x16x16xf32>
    %cst_24 = arith.constant dense<0.000000e+00> : vector<1xf32>
    %95 = vector.multi_reduction <add>, %94, %cst_24 [1, 2] : vector<1x16x16xf32> to vector<1xf32>
    %96 = vector.shape_cast %95 : vector<1xf32> to vector<1x1x1xf32>
    %97 = vector.extract %96[0, 0, 0] : f32 from vector<1x1x1xf32>
    %98 = arith.addf %80, %97 : f32
    %99 = arith.mulf %7, %7 : vector<16x64xf32>
    %100 = vector.shape_cast %99 : vector<16x64xf32> to vector<1x16x64xf32>
    %cst_25 = arith.constant dense<0.000000e+00> : vector<1xf32>
    %101 = vector.multi_reduction <add>, %100, %cst_25 [1, 2] : vector<1x16x64xf32> to vector<1xf32>
    %102 = vector.shape_cast %101 : vector<1xf32> to vector<1x1x1xf32>
    %103 = vector.extract %102[0, 0, 0] : f32 from vector<1x1x1xf32>
    %104 = arith.mulf %9, %9 : vector<16x64xf32>
    %105 = vector.shape_cast %104 : vector<16x64xf32> to vector<1x16x64xf32>
    %cst_26 = arith.constant dense<0.000000e+00> : vector<1xf32>
    %106 = vector.multi_reduction <add>, %105, %cst_26 [1, 2] : vector<1x16x64xf32> to vector<1xf32>
    %107 = vector.shape_cast %106 : vector<1xf32> to vector<1x1x1xf32>
    %108 = vector.extract %107[0, 0, 0] : f32 from vector<1x1x1xf32>
    %cst_27 = arith.constant 1.600000e+01 : f32
    %109 = arith.mulf %cst_27, %19 : f32
    %cst_28 = arith.constant 1.600000e+01 : f32
    %110 = arith.mulf %cst_28, %90 : f32
    %111 = arith.addf %109, %110 : f32
    %cst_29 = arith.constant 2.560000e+02 : f32
    %112 = arith.mulf %cst_29, %103 : f32
    %113 = arith.addf %111, %112 : f32
    %cst_30 = arith.constant 1.600000e+01 : f32
    %114 = arith.mulf %cst_30, %25 : f32
    %cst_31 = arith.constant 1.600000e+01 : f32
    %115 = arith.mulf %cst_31, %98 : f32
    %116 = arith.addf %114, %115 : f32
    %cst_32 = arith.constant 2.560000e+02 : f32
    %117 = arith.mulf %cst_32, %108 : f32
    %118 = arith.addf %116, %117 : f32
    %c0_i32 = arith.constant 0 : i32
    %119 = vector.broadcast %c0_i32 : i32 to vector<1x128xi32>
    %120 = arith.cmpi eq, %2, %119 : vector<1x128xi32>
    %c1_i32 = arith.constant 1 : i32
    %121 = vector.broadcast %c1_i32 : i32 to vector<1x128xi32>
    %122 = arith.cmpi eq, %2, %121 : vector<1x128xi32>
    %cst_33 = arith.constant 0.000000e+00 : f32
    %123 = vector.broadcast %118 : f32 to vector<1x128xf32>
    %124 = vector.broadcast %cst_33 : f32 to vector<1x128xf32>
    %125 = arith.select %122, %123, %124 : vector<1x128xi1>, vector<1x128xf32>
    %126 = vector.broadcast %113 : f32 to vector<1x128xf32>
    %127 = arith.select %120, %126, %125 : vector<1x128xi1>, vector<1x128xf32>
    %128 = vector.extract_strided_slice %5 {offsets = [1, 0, 0], sizes = [1, 16, 64], strides = [1, 1, 1]} : vector<2x16x64xf32> to vector<1x16x64xf32>
    %129 = vector.shape_cast %128 : vector<1x16x64xf32> to vector<16x64xf32>
    %130 = vector.extract_strided_slice %4 {offsets = [1, 0, 0], sizes = [1, 16, 64], strides = [1, 1, 1]} : vector<2x16x64xf32> to vector<1x16x64xf32>
    %131 = vector.shape_cast %130 : vector<1x16x64xf32> to vector<16x64xf32>
    %132 = arith.truncf %129 : vector<16x64xf32> to vector<16x64xbf16>
    %133 = arith.truncf %131 : vector<16x64xf32> to vector<16x64xbf16>
    %134 = tpu.concatenate %132, %133 in 1 : vector<16x64xbf16>, vector<16x64xbf16> -> vector<16x128xbf16>
    %cst_34 = arith.constant dense<0.000000e+00> : vector<16x128xf32>
    %135 = tpu.matmul %0, %134, %cst_34 {dimension_numbers = #tpu.dot_dimension_numbers<[1], [0], [0], [1], [0, 0, 1, 1], [], []>} : vector<16x16xbf16>, vector<16x128xbf16>, vector<16x128xf32> -> vector<16x128xf32>
    %136 = vector.extract_strided_slice %135 {offsets = [0, 0], sizes = [16, 64], strides = [1, 1]} : vector<16x128xf32> to vector<16x64xf32>
    %137 = arith.mulf %129, %136 : vector<16x64xf32>
    %138 = vector.shape_cast %137 : vector<16x64xf32> to vector<1x16x64xf32>
    %cst_35 = arith.constant dense<0.000000e+00> : vector<1xf32>
    %139 = vector.multi_reduction <add>, %138, %cst_35 [1, 2] : vector<1x16x64xf32> to vector<1xf32>
    %140 = vector.shape_cast %139 : vector<1xf32> to vector<1x1x1xf32>
    %141 = vector.extract %140[0, 0, 0] : f32 from vector<1x1x1xf32>
    %142 = vector.extract_strided_slice %135 {offsets = [0, 64], sizes = [16, 64], strides = [1, 1]} : vector<16x128xf32> to vector<16x64xf32>
    %143 = arith.mulf %131, %142 : vector<16x64xf32>
    %144 = vector.shape_cast %143 : vector<16x64xf32> to vector<1x16x64xf32>
    %cst_36 = arith.constant dense<0.000000e+00> : vector<1xf32>
    %145 = vector.multi_reduction <add>, %144, %cst_36 [1, 2] : vector<1x16x64xf32> to vector<1xf32>
    %146 = vector.shape_cast %145 : vector<1xf32> to vector<1x1x1xf32>
    %147 = vector.extract %146[0, 0, 0] : f32 from vector<1x1x1xf32>
    %148 = tpu.concatenate %132, %133 in 0 : vector<16x64xbf16>, vector<16x64xbf16> -> vector<32x64xbf16>
    %149 = vector.extract_strided_slice %148 {offsets = [0, 0], sizes = [32, 16], strides = [1, 1]} : vector<32x64xbf16> to vector<32x16xbf16>
    %cst_37 = arith.constant dense<0.000000e+00> : vector<32x16xf32>
    %150 = tpu.matmul %149, %1, %cst_37 {dimension_numbers = #tpu.dot_dimension_numbers<[1], [0], [0], [1], [0, 0, 1, 1], [], []>} : vector<32x16xbf16>, vector<16x16xbf16>, vector<32x16xf32> -> vector<32x16xf32>
    %151 = vector.extract_strided_slice %129 {offsets = [0, 0], sizes = [16, 16], strides = [1, 1]} : vector<16x64xf32> to vector<16x16xf32>
    %152 = vector.extract_strided_slice %150 {offsets = [0, 0], sizes = [16, 16], strides = [1, 1]} : vector<32x16xf32> to vector<16x16xf32>
    %153 = arith.mulf %151, %152 : vector<16x16xf32>
    %154 = vector.shape_cast %153 : vector<16x16xf32> to vector<1x16x16xf32>
    %cst_38 = arith.constant dense<0.000000e+00> : vector<1xf32>
    %155 = vector.multi_reduction <add>, %154, %cst_38 [1, 2] : vector<1x16x16xf32> to vector<1xf32>
    %156 = vector.shape_cast %155 : vector<1xf32> to vector<1x1x1xf32>
    %157 = vector.extract %156[0, 0, 0] : f32 from vector<1x1x1xf32>
    %cst_39 = arith.constant 0.000000e+00 : f32
    %158 = arith.addf %cst_39, %157 : f32
    %159 = vector.extract_strided_slice %131 {offsets = [0, 0], sizes = [16, 16], strides = [1, 1]} : vector<16x64xf32> to vector<16x16xf32>
    %160 = vector.extract_strided_slice %150 {offsets = [16, 0], sizes = [16, 16], strides = [1, 1]} : vector<32x16xf32> to vector<16x16xf32>
    %161 = arith.mulf %159, %160 : vector<16x16xf32>
    %162 = vector.shape_cast %161 : vector<16x16xf32> to vector<1x16x16xf32>
    %cst_40 = arith.constant dense<0.000000e+00> : vector<1xf32>
    %163 = vector.multi_reduction <add>, %162, %cst_40 [1, 2] : vector<1x16x16xf32> to vector<1xf32>
    %164 = vector.shape_cast %163 : vector<1xf32> to vector<1x1x1xf32>
    %165 = vector.extract %164[0, 0, 0] : f32 from vector<1x1x1xf32>
    %cst_41 = arith.constant 0.000000e+00 : f32
    %166 = arith.addf %cst_41, %165 : f32
    %167 = vector.extract_strided_slice %148 {offsets = [0, 16], sizes = [32, 16], strides = [1, 1]} : vector<32x64xbf16> to vector<32x16xbf16>
    %cst_42 = arith.constant dense<0.000000e+00> : vector<32x16xf32>
    %168 = tpu.matmul %167, %1, %cst_42 {dimension_numbers = #tpu.dot_dimension_numbers<[1], [0], [0], [1], [0, 0, 1, 1], [], []>} : vector<32x16xbf16>, vector<16x16xbf16>, vector<32x16xf32> -> vector<32x16xf32>
    %169 = vector.extract_strided_slice %129 {offsets = [0, 16], sizes = [16, 16], strides = [1, 1]} : vector<16x64xf32> to vector<16x16xf32>
    %170 = vector.extract_strided_slice %168 {offsets = [0, 0], sizes = [16, 16], strides = [1, 1]} : vector<32x16xf32> to vector<16x16xf32>
    %171 = arith.mulf %169, %170 : vector<16x16xf32>
    %172 = vector.shape_cast %171 : vector<16x16xf32> to vector<1x16x16xf32>
    %cst_43 = arith.constant dense<0.000000e+00> : vector<1xf32>
    %173 = vector.multi_reduction <add>, %172, %cst_43 [1, 2] : vector<1x16x16xf32> to vector<1xf32>
    %174 = vector.shape_cast %173 : vector<1xf32> to vector<1x1x1xf32>
    %175 = vector.extract %174[0, 0, 0] : f32 from vector<1x1x1xf32>
    %176 = arith.addf %158, %175 : f32
    %177 = vector.extract_strided_slice %131 {offsets = [0, 16], sizes = [16, 16], strides = [1, 1]} : vector<16x64xf32> to vector<16x16xf32>
    %178 = vector.extract_strided_slice %168 {offsets = [16, 0], sizes = [16, 16], strides = [1, 1]} : vector<32x16xf32> to vector<16x16xf32>
    %179 = arith.mulf %177, %178 : vector<16x16xf32>
    %180 = vector.shape_cast %179 : vector<16x16xf32> to vector<1x16x16xf32>
    %cst_44 = arith.constant dense<0.000000e+00> : vector<1xf32>
    %181 = vector.multi_reduction <add>, %180, %cst_44 [1, 2] : vector<1x16x16xf32> to vector<1xf32>
    %182 = vector.shape_cast %181 : vector<1xf32> to vector<1x1x1xf32>
    %183 = vector.extract %182[0, 0, 0] : f32 from vector<1x1x1xf32>
    %184 = arith.addf %166, %183 : f32
    %185 = vector.extract_strided_slice %148 {offsets = [0, 32], sizes = [32, 16], strides = [1, 1]} : vector<32x64xbf16> to vector<32x16xbf16>
    %cst_45 = arith.constant dense<0.000000e+00> : vector<32x16xf32>
    %186 = tpu.matmul %185, %1, %cst_45 {dimension_numbers = #tpu.dot_dimension_numbers<[1], [0], [0], [1], [0, 0, 1, 1], [], []>} : vector<32x16xbf16>, vector<16x16xbf16>, vector<32x16xf32> -> vector<32x16xf32>
    %187 = vector.extract_strided_slice %129 {offsets = [0, 32], sizes = [16, 16], strides = [1, 1]} : vector<16x64xf32> to vector<16x16xf32>
    %188 = vector.extract_strided_slice %186 {offsets = [0, 0], sizes = [16, 16], strides = [1, 1]} : vector<32x16xf32> to vector<16x16xf32>
    %189 = arith.mulf %187, %188 : vector<16x16xf32>
    %190 = vector.shape_cast %189 : vector<16x16xf32> to vector<1x16x16xf32>
    %cst_46 = arith.constant dense<0.000000e+00> : vector<1xf32>
    %191 = vector.multi_reduction <add>, %190, %cst_46 [1, 2] : vector<1x16x16xf32> to vector<1xf32>
    %192 = vector.shape_cast %191 : vector<1xf32> to vector<1x1x1xf32>
    %193 = vector.extract %192[0, 0, 0] : f32 from vector<1x1x1xf32>
    %194 = arith.addf %176, %193 : f32
    %195 = vector.extract_strided_slice %131 {offsets = [0, 32], sizes = [16, 16], strides = [1, 1]} : vector<16x64xf32> to vector<16x16xf32>
    %196 = vector.extract_strided_slice %186 {offsets = [16, 0], sizes = [16, 16], strides = [1, 1]} : vector<32x16xf32> to vector<16x16xf32>
    %197 = arith.mulf %195, %196 : vector<16x16xf32>
    %198 = vector.shape_cast %197 : vector<16x16xf32> to vector<1x16x16xf32>
    %cst_47 = arith.constant dense<0.000000e+00> : vector<1xf32>
    %199 = vector.multi_reduction <add>, %198, %cst_47 [1, 2] : vector<1x16x16xf32> to vector<1xf32>
    %200 = vector.shape_cast %199 : vector<1xf32> to vector<1x1x1xf32>
    %201 = vector.extract %200[0, 0, 0] : f32 from vector<1x1x1xf32>
    %202 = arith.addf %184, %201 : f32
    %203 = vector.extract_strided_slice %148 {offsets = [0, 48], sizes = [32, 16], strides = [1, 1]} : vector<32x64xbf16> to vector<32x16xbf16>
    %cst_48 = arith.constant dense<0.000000e+00> : vector<32x16xf32>
    %204 = tpu.matmul %203, %1, %cst_48 {dimension_numbers = #tpu.dot_dimension_numbers<[1], [0], [0], [1], [0, 0, 1, 1], [], []>} : vector<32x16xbf16>, vector<16x16xbf16>, vector<32x16xf32> -> vector<32x16xf32>
    %205 = vector.extract_strided_slice %129 {offsets = [0, 48], sizes = [16, 16], strides = [1, 1]} : vector<16x64xf32> to vector<16x16xf32>
    %206 = vector.extract_strided_slice %204 {offsets = [0, 0], sizes = [16, 16], strides = [1, 1]} : vector<32x16xf32> to vector<16x16xf32>
    %207 = arith.mulf %205, %206 : vector<16x16xf32>
    %208 = vector.shape_cast %207 : vector<16x16xf32> to vector<1x16x16xf32>
    %cst_49 = arith.constant dense<0.000000e+00> : vector<1xf32>
    %209 = vector.multi_reduction <add>, %208, %cst_49 [1, 2] : vector<1x16x16xf32> to vector<1xf32>
    %210 = vector.shape_cast %209 : vector<1xf32> to vector<1x1x1xf32>
    %211 = vector.extract %210[0, 0, 0] : f32 from vector<1x1x1xf32>
    %212 = arith.addf %194, %211 : f32
    %213 = vector.extract_strided_slice %131 {offsets = [0, 48], sizes = [16, 16], strides = [1, 1]} : vector<16x64xf32> to vector<16x16xf32>
    %214 = vector.extract_strided_slice %204 {offsets = [16, 0], sizes = [16, 16], strides = [1, 1]} : vector<32x16xf32> to vector<16x16xf32>
    %215 = arith.mulf %213, %214 : vector<16x16xf32>
    %216 = vector.shape_cast %215 : vector<16x16xf32> to vector<1x16x16xf32>
    %cst_50 = arith.constant dense<0.000000e+00> : vector<1xf32>
    %217 = vector.multi_reduction <add>, %216, %cst_50 [1, 2] : vector<1x16x16xf32> to vector<1xf32>
    %218 = vector.shape_cast %217 : vector<1xf32> to vector<1x1x1xf32>
    %219 = vector.extract %218[0, 0, 0] : f32 from vector<1x1x1xf32>
    %220 = arith.addf %202, %219 : f32
    %221 = arith.mulf %129, %129 : vector<16x64xf32>
    %222 = vector.shape_cast %221 : vector<16x64xf32> to vector<1x16x64xf32>
    %cst_51 = arith.constant dense<0.000000e+00> : vector<1xf32>
    %223 = vector.multi_reduction <add>, %222, %cst_51 [1, 2] : vector<1x16x64xf32> to vector<1xf32>
    %224 = vector.shape_cast %223 : vector<1xf32> to vector<1x1x1xf32>
    %225 = vector.extract %224[0, 0, 0] : f32 from vector<1x1x1xf32>
    %226 = arith.mulf %131, %131 : vector<16x64xf32>
    %227 = vector.shape_cast %226 : vector<16x64xf32> to vector<1x16x64xf32>
    %cst_52 = arith.constant dense<0.000000e+00> : vector<1xf32>
    %228 = vector.multi_reduction <add>, %227, %cst_52 [1, 2] : vector<1x16x64xf32> to vector<1xf32>
    %229 = vector.shape_cast %228 : vector<1xf32> to vector<1x1x1xf32>
    %230 = vector.extract %229[0, 0, 0] : f32 from vector<1x1x1xf32>
    %cst_53 = arith.constant 1.600000e+01 : f32
    %231 = arith.mulf %cst_53, %141 : f32
    %cst_54 = arith.constant 1.600000e+01 : f32
    %232 = arith.mulf %cst_54, %212 : f32
    %233 = arith.addf %231, %232 : f32
    %cst_55 = arith.constant 2.560000e+02 : f32
    %234 = arith.mulf %cst_55, %225 : f32
    %235 = arith.addf %233, %234 : f32
    %cst_56 = arith.constant 1.600000e+01 : f32
    %236 = arith.mulf %cst_56, %147 : f32
    %cst_57 = arith.constant 1.600000e+01 : f32
    %237 = arith.mulf %cst_57, %220 : f32
    %238 = arith.addf %236, %237 : f32
    %cst_58 = arith.constant 2.560000e+02 : f32
    %239 = arith.mulf %cst_58, %230 : f32
    %240 = arith.addf %238, %239 : f32
    %c0_i32_59 = arith.constant 0 : i32
    %241 = vector.broadcast %c0_i32_59 : i32 to vector<1x128xi32>
    %242 = arith.cmpi eq, %2, %241 : vector<1x128xi32>
    %c1_i32_60 = arith.constant 1 : i32
    %243 = vector.broadcast %c1_i32_60 : i32 to vector<1x128xi32>
    %244 = arith.cmpi eq, %2, %243 : vector<1x128xi32>
    %cst_61 = arith.constant 0.000000e+00 : f32
    %245 = vector.broadcast %240 : f32 to vector<1x128xf32>
    %246 = vector.broadcast %cst_61 : f32 to vector<1x128xf32>
    %247 = arith.select %244, %245, %246 : vector<1x128xi1>, vector<1x128xf32>
    %248 = vector.broadcast %235 : f32 to vector<1x128xf32>
    %249 = arith.select %242, %248, %247 : vector<1x128xi1>, vector<1x128xf32>
    %250 = tpu.concatenate %127, %249 in 0 : vector<1x128xf32>, vector<1x128xf32> -> vector<2x128xf32>
    %c0_62 = arith.constant 0 : index
    %c0_63 = arith.constant 0 : index
    %c0_64 = arith.constant 0 : index
    %c0_65 = arith.constant 0 : index
    %251 = vector.load %arg6[%c0_62, %c0_63, %c0_64, %c0_65] : memref<1x1x2x128xf32, #tpu.memory_space<vmem>>, vector<1x1x2x128xf32>
    %252 = vector.shape_cast %251 : vector<1x1x2x128xf32> to vector<2x128xf32>
    %253 = vector.shape_cast %250 : vector<2x128xf32> to vector<1x1x2x128xf32>
    tpu.vector_store %arg6[%c0_62, %c0_63, %c0_64, %c0_65], %253 {strides = array<i32>} : memref<1x1x2x128xf32, #tpu.memory_space<vmem>>, vector<1x1x2x128xf32>,
    return
  }
  func.func @transform_0(%arg0: i32, %arg1: i32) -> (i32, i32, i32) {
    %c0_i32 = arith.constant 0 : i32
    %c0_i32_0 = arith.constant 0 : i32
    return %arg0, %c0_i32, %arg1 : i32, i32, i32
  }
  func.func @transform_1(%arg0: i32, %arg1: i32) -> (i32, i32, i32) {
    %c0_i32 = arith.constant 0 : i32
    %c0_i32_0 = arith.constant 0 : i32
    return %arg0, %c0_i32, %arg1 : i32, i32, i32
  }
  func.func @transform_2(%arg0: i32, %arg1: i32) -> (i32, i32) {
    %c0_i32 = arith.constant 0 : i32
    %c0_i32_0 = arith.constant 0 : i32
    %c0_i32_1 = arith.constant 0 : i32
    return %c0_i32, %c0_i32_0 : i32, i32
  }
  func.func @transform_3(%arg0: i32, %arg1: i32) -> (i32, i32) {
    %c0_i32 = arith.constant 0 : i32
    %c0_i32_0 = arith.constant 0 : i32
    %c0_i32_1 = arith.constant 0 : i32
    return %c0_i32, %c0_i32_0 : i32, i32
  }
  func.func @transform_4(%arg0: i32, %arg1: i32) -> (i32, i32, i32, i32) {
    %c0_i32 = arith.constant 0 : i32
    %c0_i32_0 = arith.constant 0 : i32
    %c0_i32_1 = arith.constant 0 : i32
    return %arg0, %arg1, %c0_i32, %c0_i32_0 : i32, i32, i32, i32
  }
}

</mosaic_0001>

<llo_original>
// kernel: tpu_custom_call.1
$region0: #{tpu_custom_call.1}
  #allocation0 [shape = 'u32[]', space=smem, size = 0x4, offset = 0x4, fixed_abs, tag = 'smem constant byte address 0x4 - core index']
  #allocation1 [shape = 'u32[144,128]{1,0:T(1,128)}', space=vmem, size = 0x12000, scoped, tag = 'internal scratch']
  %s0 = inlined_call_operand.hbm [shape: f32[2,16,64], index: 0, kind: input, shape index: {}]
  %s1 = inlined_call_operand.hbm [shape: f32[2,16,64], index: 1, kind: input, shape index: {}]
  %s2 = inlined_call_operand.hbm [shape: bf16[16,16], index: 2, kind: input, shape index: {}]
  %s3 = inlined_call_operand.vmem [shape: bf16[16,16], index: 3, kind: input, shape index: {}]
  %s4 = inlined_call_operand.hbm [shape: f32[1,1,2,128], index: 4, kind: output, shape index: {}]
  %s5 = sld [smem:[#allocation0]]
  $region38: #{tpu_custom_call.1} parent=0
    _
  %s7 = ssub.s32 1, %s5
  %s8 = scalar_select 0, %s7, %s5
  $region1: #{tpu_custom_call.1} parent=0
    #allocation2 [shape = 'u8[16384]{0}', space=vmem, size = 0x4000, scoped, tag = 'input window, operand 0, single buffered']
    #allocation3 [shape = 's32[1]{0}', space=sflag, size = 0x4, scoped, tag = 'scoped memory for tpu_custom_call.1']
    #allocation4 [shape = 's32[1]{0}', space=sflag, size = 0x4, scoped, tag = 'scoped memory for tpu_custom_call.1']
    #allocation5 [shape = 'u8[16384]{0}', space=vmem, size = 0x4000, scoped, tag = 'input window, operand 1, single buffered']
    #allocation6 [shape = 's32[1]{0}', space=sflag, size = 0x4, scoped, tag = 'scoped memory for tpu_custom_call.1']
    #allocation7 [shape = 'u8[4096]{0}', space=vmem, size = 0x1000, scoped, tag = 'input window, operand 2, single buffered']
    #allocation8 [shape = 'u8[1024]{0}', space=vmem, size = 0x400, scoped, tag = 'output window, operand 0, single buffered']
    %9 = vsyncpa [#allocation3], 0
    %10 = vsyncpa [#allocation6], 0
    %11 = vsyncpa [#allocation4], 0
    // Predicated region
    $region2: #{tpu_custom_call.1} parent=1 // pred_check
      _
    $region3: #{tpu_custom_call.1} parent=1 // pred_check_branch
      %13 = sbr.rel (0) target = $region5
    $region4: #{tpu_custom_call.1} parent=1 // pred_region
      %s15 = ssub.s32 512, 512
      %16 = vsyncadd [#allocation3], %s15
      %s17 = sshll.u32 [#allocation2], 4
      %s18 = int_to_ptr.vmem [resolvable:$true] %s17
      %23 = dma.hbm_to_vmem [thread:$0]  %s0, 512, %s18, [#allocation3], 128, 128, 8
    $region5: #{tpu_custom_call.1} parent=1 // pred_fallthru
      _
    // Predicated region
    $region6: #{tpu_custom_call.1} parent=1 // pred_check
      _
    $region7: #{tpu_custom_call.1} parent=1 // pred_check_branch
      %25 = sbr.rel (0) target = $region9
    $region8: #{tpu_custom_call.1} parent=1 // pred_region
      %s27 = ssub.s32 512, 512
      %28 = vsyncadd [#allocation6], %s27
      %s29 = sshll.u32 [#allocation5], 4
      %s30 = int_to_ptr.vmem [resolvable:$true] %s29
      %35 = dma.hbm_to_vmem [thread:$0]  %s1, 512, %s30, [#allocation6], 128, 128, 8
    $region9: #{tpu_custom_call.1} parent=1 // pred_fallthru
      _
    // Predicated region
    $region10: #{tpu_custom_call.1} parent=1 // pred_check
      _
    $region11: #{tpu_custom_call.1} parent=1 // pred_check_branch
      %37 = sbr.rel (0) target = $region13
    $region12: #{tpu_custom_call.1} parent=1 // pred_region
      %s39 = ssub.s32 128, 128
      %40 = vsyncadd [#allocation6], %s39
      %s41 = sshll.u32 [#allocation7], 4
      %s42 = int_to_ptr.vmem [resolvable:$true] %s41
      %47 = dma.hbm_to_vmem [thread:$0]  %s2, 128, %s42, [#allocation6], 64, 64, 4
    $region13: #{tpu_custom_call.1} parent=1 // pred_fallthru
      _
    // Predicated region
    $region14: #{tpu_custom_call.1} parent=1 // pred_check
      _
    $region15: #{tpu_custom_call.1} parent=1 // pred_check_branch
      %49 = sbr.rel (0) target = $region17
    $region16: #{tpu_custom_call.1} parent=1 // pred_region
      _
    $region17: #{tpu_custom_call.1} parent=1 // pred_fallthru
      _
    // Predicated region
    $region18: #{tpu_custom_call.1} parent=1 // pred_check
      _
    $region19: #{tpu_custom_call.1} parent=1 // pred_check_branch
      %51 = sbr.rel (0) target = $region21
    $region20: #{tpu_custom_call.1} parent=1 // pred_region
      %52 = dma.done [#allocation3], 512
    $region21: #{tpu_custom_call.1} parent=1 // pred_fallthru
      _
    // Predicated region
    $region22: #{tpu_custom_call.1} parent=1 // pred_check
      _
    $region23: #{tpu_custom_call.1} parent=1 // pred_check_branch
      %54 = sbr.rel (0) target = $region25
    $region24: #{tpu_custom_call.1} parent=1 // pred_region
      %55 = dma.done [#allocation6], 512
    $region25: #{tpu_custom_call.1} parent=1 // pred_fallthru
      _
    // Predicated region
    $region26: #{tpu_custom_call.1} parent=1 // pred_check
      _
    $region27: #{tpu_custom_call.1} parent=1 // pred_check_branch
      %57 = sbr.rel (0) target = $region29
    $region28: #{tpu_custom_call.1} parent=1 // pred_region
      %58 = dma.done [#allocation6], 128
    $region29: #{tpu_custom_call.1} parent=1 // pred_fallthru
      _
    %v60 = vld [vmem:[#allocation7] sm:$0xf]
    %v61 = vld [vmem:[#allocation7 + $0x4] sm:$0xf]
    %v62 = vld [vmem:[%s3] sm:$0xf]
    %v63 = vld [vmem:[%s3 + $0x4] sm:$0xf]
    %v64 = vlaneseq
    %v65 = vand.u32 %v64, 127
    %v66 = vld [vmem:[#allocation2] sm:$0xff]
    %v67 = vld [vmem:[#allocation2 + $0x8] sm:$0xff]
    %v68 = vld [vmem:[#allocation2 + $0x10] sm:$0xff]
    %v69 = vld [vmem:[#allocation2 + $0x18] sm:$0xff]
    %v70 = vld [vmem:[#allocation5] sm:$0xff]
    %v71 = vld [vmem:[#allocation5 + $0x8] sm:$0xff]
    %v72 = vld [vmem:[#allocation5 + $0x10] sm:$0xff]
    %v73 = vld [vmem:[#allocation5 + $0x18] sm:$0xff]
    %v74 = vsub.f32 %v66, %v70
    %v75 = vsub.f32 %v67, %v71
    %v76 = vsub.f32 %v68, %v72
    %v77 = vsub.f32 %v69, %v73
    %v78 = vpack.c.bf16 %v75, %v74
    %v79 = vpack.c.bf16 %v71, %v70
    %81 = vrot.lane.b32.xlu0 %v79, 64
    %v82 = vpop.permute.xlu0 %81
    %vm83 = vcmask 523264
    %v86 = vsel %vm83, %v78, %v82
    %v90 = vunpack.c.l.b16 %v60
    %v91 = vunpack.c.l.b16 %v61
    %v92 = vpack.c.b16 %v91, %v90
    %vm93 = vcmask 130048
    %v95 = vsel %vm93, %v92, 0
    %97 = vmatprep.subr.bf16.mxu0 0
    %98 = vmatpush1.bf16.msra.mxu0 %v86
    %99 = vmatprep.subr.bf16.mxu0 0
    %100 = vmatpush1.bf16.msra.mxu0 0
    %101 = vmatprep.subr.bf16.mxu0 0
    %102 = vmatpush1.bf16.msra.mxu0 0
    %103 = vmatprep.subr.bf16.mxu0 0
    %104 = vmatpush1.bf16.msra.mxu0 0
    %105 = vmatprep.subr.bf16.mxu0 0
    %106 = vmatpush1.bf16.msra.mxu0 0
    %107 = vmatprep.subr.bf16.mxu0 0
    %108 = vmatpush1.bf16.msra.mxu0 0
    %109 = vmatprep.subr.bf16.mxu0 0
    %110 = vmatpush1.bf16.msra.mxu0 0
    %111 = vmatprep.subr.bf16.mxu0 0
    %112 = vmatpush1.bf16.msra.mxu0 0
    %113 = vmatprep.subr.bf16.mxu0 0
    %114 = vmatpush1.bf16.msra.mxu0 0
    %115 = vmatprep.subr.bf16.mxu0 0
    %116 = vmatpush1.bf16.msra.mxu0 0
    %117 = vmatprep.subr.bf16.mxu0 0
    %118 = vmatpush1.bf16.msra.mxu0 0
    %119 = vmatprep.subr.bf16.mxu0 0
    %120 = vmatpush1.bf16.msra.mxu0 0
    %121 = vmatprep.subr.bf16.mxu0 0
    %122 = vmatpush1.bf16.msra.mxu0 0
    %123 = vmatprep.subr.bf16.mxu0 0
    %124 = vmatpush1.bf16.msra.mxu0 0
    %125 = vmatprep.subr.bf16.mxu0 0
    %126 = vmatpush1.bf16.msra.mxu0 0
    %127 = vmatprep.subr.bf16.mxu0 0
    %128 = vmatpush1.bf16.msra.mxu0 0
    %129 = vmatprep.mubr.bf16.mxu0 0
    %130 = vmatmul.mubr.bf16.gmra.mrb[0].mxu0 %v95
    %v131 = vpop.f32.mrb[0].mxu0
    %v132 = vadd.f32 0.0, %v131
    %v133 = vpop.f32.mrb[0].mxu0
    %v134 = vpop.f32.mrb[0].mxu0
    %v135 = vadd.f32 0.0, %v134
    %v136 = vpop.f32.mrb[0].mxu0
    %137 = vdwg.mxu0
    %v138 = vmul.f32 %v74, %v132
    %v139 = vmul.f32 %v75, %v135
    %v140 = vsel %vm83, %v138, 0.0
    %v141 = vsel %vm83, %v139, 0.0
    %v142 = vadd.f32 %v140, %v141
    %143 = vadd.xlane.f32.xlu0 %v142
    %v144 = vpop.xlane.xlu0 %143
    %v145 = vrot.slane %v144, 4
    %v146 = vadd.f32 %v144, %v145
    %v147 = vrot.slane %v146, 2
    %v148 = vadd.f32 %v146, %v147
    %v149 = vrot.slane %v148, 1
    %v150 = vadd.f32 %v148, %v149
    %s151 = vtos %v150
    %154 = vrot.lane.b32.xlu0 %v132, 64
    %v155 = vpop.permute.xlu0 %154
    %156 = vrot.lane.b32.xlu0 %v135, 64
    %v157 = vpop.permute.xlu0 %156
    %v160 = vmul.f32 %v70, %v155
    %v161 = vmul.f32 %v71, %v157
    %v162 = vsel %vm83, %v160, 0.0
    %v163 = vsel %vm83, %v161, 0.0
    %v164 = vadd.f32 %v162, %v163
    %165 = vadd.xlane.f32.xlu0 %v164
    %v166 = vpop.xlane.xlu0 %165
    %v167 = vrot.slane %v166, 4
    %v168 = vadd.f32 %v166, %v167
    %v169 = vrot.slane %v168, 2
    %v170 = vadd.f32 %v168, %v169
    %v171 = vrot.slane %v170, 1
    %v172 = vadd.f32 %v170, %v171
    %s173 = vtos %v172
    %v176 = vunpack.c.l.b16 %v62
    %v177 = vunpack.c.l.b16 %v63
    %v178 = vpack.c.b16 %v177, %v176
    %v180 = vsel %vm93, %v78, 0
    %v183 = vsel %vm93, %v79, 0
    %185 = vmatprep.subr.bf16.mxu0 0
    %186 = vmatpush1.bf16.msra.mxu0 %v178
    %187 = vmatprep.subr.bf16.mxu0 0
    %188 = vmatpush1.bf16.msra.mxu0 0
    %189 = vmatprep.subr.bf16.mxu0 0
    %190 = vmatpush1.bf16.msra.mxu0 0
    %191 = vmatprep.subr.bf16.mxu0 0
    %192 = vmatpush1.bf16.msra.mxu0 0
    %193 = vmatprep.subr.bf16.mxu0 0
    %194 = vmatpush1.bf16.msra.mxu0 0
    %195 = vmatprep.subr.bf16.mxu0 0
    %196 = vmatpush1.bf16.msra.mxu0 0
    %197 = vmatprep.subr.bf16.mxu0 0
    %198 = vmatpush1.bf16.msra.mxu0 0
    %199 = vmatprep.subr.bf16.mxu0 0
    %200 = vmatpush1.bf16.msra.mxu0 0
    %201 = vmatprep.subr.bf16.mxu0 0
    %202 = vmatpush1.bf16.msra.mxu0 0
    %203 = vmatprep.subr.bf16.mxu0 0
    %204 = vmatpush1.bf16.msra.mxu0 0
    %205 = vmatprep.subr.bf16.mxu0 0
    %206 = vmatpush1.bf16.msra.mxu0 0
    %207 = vmatprep.subr.bf16.mxu0 0
    %208 = vmatpush1.bf16.msra.mxu0 0
    %209 = vmatprep.subr.bf16.mxu0 0
    %210 = vmatpush1.bf16.msra.mxu0 0
    %211 = vmatprep.subr.bf16.mxu0 0
    %212 = vmatpush1.bf16.msra.mxu0 0
    %213 = vmatprep.subr.bf16.mxu0 0
    %214 = vmatpush1.bf16.msra.mxu0 0
    %215 = vmatprep.subr.bf16.mxu0 0
    %216 = vmatpush1.bf16.msra.mxu0 0
    %217 = vmatprep.mubr.bf16.mxu0 0
    %218 = vmatmul.mubr.bf16.gmra.mrb[0].mxu0 %v180
    %v219 = vpop.f32.mrb[0].mxu0
    %v220 = vadd.f32 0.0, %v219
    %v221 = vpop.f32.mrb[0].mxu0
    %v222 = vpop.f32.mrb[0].mxu0
    %v223 = vadd.f32 0.0, %v222
    %v224 = vpop.f32.mrb[0].mxu0
    %225 = vmatprep.mubr.bf16.mxu0 0
    %226 = vmatmul.mubr.bf16.gmra.mrb[0].mxu0 %v183
    %v227 = vpop.f32.mrb[0].mxu0
    %v228 = vadd.f32 0.0, %v227
    %v229 = vpop.f32.mrb[0].mxu0
    %v230 = vpop.f32.mrb[0].mxu0
    %v231 = vadd.f32 0.0, %v230
    %v232 = vpop.f32.mrb[0].mxu0
    %233 = vdwg.mxu0
    %v234 = vmul.f32 %v74, %v220
    %v235 = vmul.f32 %v75, %v223
    %v236 = vsel %vm93, %v234, 0.0
    %v237 = vsel %vm93, %v235, 0.0
    %v238 = vadd.f32 %v236, %v237
    %239 = vadd.xlane.f32.xlu0 %v238
    %v240 = vpop.xlane.xlu0 %239
    %v241 = vrot.slane %v240, 4
    %v242 = vadd.f32 %v240, %v241
    %v243 = vrot.slane %v242, 2
    %v244 = vadd.f32 %v242, %v243
    %v245 = vrot.slane %v244, 1
    %v246 = vadd.f32 %v244, %v245
    %s247 = vtos %v246
    %s248 = sadd.f32 %s247, 0.0
    %v249 = vmul.f32 %v70, %v228
    %v250 = vmul.f32 %v71, %v231
    %v251 = vsel %vm93, %v249, 0.0
    %v252 = vsel %vm93, %v250, 0.0
    %v253 = vadd.f32 %v251, %v252
    %254 = vadd.xlane.f32.xlu0 %v253
    %v255 = vpop.xlane.xlu0 %254
    %v256 = vrot.slane %v255, 4
    %v257 = vadd.f32 %v255, %v256
    %v258 = vrot.slane %v257, 2
    %v259 = vadd.f32 %v257, %v258
    %v260 = vrot.slane %v259, 1
    %v261 = vadd.f32 %v259, %v260
    %s262 = vtos %v261
    %s263 = sadd.f32 %s262, 0.0
    %265 = vrot.lane.b32.xlu0 %v78, 112
    %v266 = vpop.permute.xlu0 %265
    %267 = vrot.lane.b32.xlu0 %v79, 112
    %v268 = vpop.permute.xlu0 %267
    %v270 = vsel %vm93, %v266, 0
    %v273 = vsel %vm93, %v268, 0
    %275 = vmatprep.subr.bf16.mxu0 0
    %276 = vmatpush1.bf16.msra.mxu0 %v178
    %277 = vmatprep.subr.bf16.mxu0 0
    %278 = vmatpush1.bf16.msra.mxu0 0
    %279 = vmatprep.subr.bf16.mxu0 0
    %280 = vmatpush1.bf16.msra.mxu0 0
    %281 = vmatprep.subr.bf16.mxu0 0
    %282 = vmatpush1.bf16.msra.mxu0 0
    %283 = vmatprep.subr.bf16.mxu0 0
    %284 = vmatpush1.bf16.msra.mxu0 0
    %285 = vmatprep.subr.bf16.mxu0 0
    %286 = vmatpush1.bf16.msra.mxu0 0
    %287 = vmatprep.subr.bf16.mxu0 0
    %288 = vmatpush1.bf16.msra.mxu0 0
    %289 = vmatprep.subr.bf16.mxu0 0
    %290 = vmatpush1.bf16.msra.mxu0 0
    %291 = vmatprep.subr.bf16.mxu0 0
    %292 = vmatpush1.bf16.msra.mxu0 0
    %293 = vmatprep.subr.bf16.mxu0 0
    %294 = vmatpush1.bf16.msra.mxu0 0
    %295 = vmatprep.subr.bf16.mxu0 0
    %296 = vmatpush1.bf16.msra.mxu0 0
    %297 = vmatprep.subr.bf16.mxu0 0
    %298 = vmatpush1.bf16.msra.mxu0 0
    %299 = vmatprep.subr.bf16.mxu0 0
    %300 = vmatpush1.bf16.msra.mxu0 0
    %301 = vmatprep.subr.bf16.mxu0 0
    %302 = vmatpush1.bf16.msra.mxu0 0
    %303 = vmatprep.subr.bf16.mxu0 0
    %304 = vmatpush1.bf16.msra.mxu0 0
    %305 = vmatprep.subr.bf16.mxu0 0
    %306 = vmatpush1.bf16.msra.mxu0 0
    %307 = vmatprep.mubr.bf16.mxu0 0
    %308 = vmatmul.mubr.bf16.gmra.mrb[0].mxu0 %v270
    %v309 = vpop.f32.mrb[0].mxu0
    %v310 = vadd.f32 0.0, %v309
    %v311 = vpop.f32.mrb[0].mxu0
    %v312 = vpop.f32.mrb[0].mxu0
    %v313 = vadd.f32 0.0, %v312
    %v314 = vpop.f32.mrb[0].mxu0
    %315 = vmatprep.mubr.bf16.mxu0 0
    %316 = vmatmul.mubr.bf16.gmra.mrb[0].mxu0 %v273
    %v317 = vpop.f32.mrb[0].mxu0
    %v318 = vadd.f32 0.0, %v317
    %v319 = vpop.f32.mrb[0].mxu0
    %v320 = vpop.f32.mrb[0].mxu0
    %v321 = vadd.f32 0.0, %v320
    %v322 = vpop.f32.mrb[0].mxu0
    %323 = vdwg.mxu0
    %326 = vrot.lane.b32.xlu0 %v310, 16
    %v327 = vpop.permute.xlu0 %326
    %328 = vrot.lane.b32.xlu0 %v313, 16
    %v329 = vpop.permute.xlu0 %328
    %v332 = vmul.f32 %v74, %v327
    %v333 = vmul.f32 %v75, %v329
    %336 = vrot.lane.b32.xlu0 %v332, 112
    %v337 = vpop.permute.xlu0 %336
    %338 = vrot.lane.b32.xlu0 %v333, 112
    %v339 = vpop.permute.xlu0 %338
    %v342 = vsel %vm93, %v337, 0.0
    %v343 = vsel %vm93, %v339, 0.0
    %v344 = vadd.f32 %v342, %v343
    %345 = vadd.xlane.f32.xlu0 %v344
    %v346 = vpop.xlane.xlu0 %345
    %v347 = vrot.slane %v346, 4
    %v348 = vadd.f32 %v346, %v347
    %v349 = vrot.slane %v348, 2
    %v350 = vadd.f32 %v348, %v349
    %v351 = vrot.slane %v350, 1
    %v352 = vadd.f32 %v350, %v351
    %s353 = vtos %v352
    %s354 = sadd.f32 %s248, %s353
    %357 = vrot.lane.b32.xlu0 %v318, 16
    %v358 = vpop.permute.xlu0 %357
    %359 = vrot.lane.b32.xlu0 %v321, 16
    %v360 = vpop.permute.xlu0 %359
    %v363 = vmul.f32 %v70, %v358
    %v364 = vmul.f32 %v71, %v360
    %367 = vrot.lane.b32.xlu0 %v363, 112
    %v368 = vpop.permute.xlu0 %367
    %369 = vrot.lane.b32.xlu0 %v364, 112
    %v370 = vpop.permute.xlu0 %369
    %v373 = vsel %vm93, %v368, 0.0
    %v374 = vsel %vm93, %v370, 0.0
    %v375 = vadd.f32 %v373, %v374
    %376 = vadd.xlane.f32.xlu0 %v375
    %v377 = vpop.xlane.xlu0 %376
    %v378 = vrot.slane %v377, 4
    %v379 = vadd.f32 %v377, %v378
    %v380 = vrot.slane %v379, 2
    %v381 = vadd.f32 %v379, %v380
    %v382 = vrot.slane %v381, 1
    %v383 = vadd.f32 %v381, %v382
    %s384 = vtos %v383
    %s385 = sadd.f32 %s263, %s384
    %386 = vrot.lane.b32.xlu0 %v78, 96
    %v387 = vpop.permute.xlu0 %386
    %388 = vrot.lane.b32.xlu0 %v79, 96
    %v389 = vpop.permute.xlu0 %388
    %v391 = vsel %vm93, %v387, 0
    %v394 = vsel %vm93, %v389, 0
    %396 = vmatprep.subr.bf16.mxu0 0
    %397 = vmatpush1.bf16.msra.mxu0 %v178
    %398 = vmatprep.subr.bf16.mxu0 0
    %399 = vmatpush1.bf16.msra.mxu0 0
    %400 = vmatprep.subr.bf16.mxu0 0
    %401 = vmatpush1.bf16.msra.mxu0 0
    %402 = vmatprep.subr.bf16.mxu0 0
    %403 = vmatpush1.bf16.msra.mxu0 0
    %404 = vmatprep.subr.bf16.mxu0 0
    %405 = vmatpush1.bf16.msra.mxu0 0
    %406 = vmatprep.subr.bf16.mxu0 0
    %407 = vmatpush1.bf16.msra.mxu0 0
    %408 = vmatprep.subr.bf16.mxu0 0
    %409 = vmatpush1.bf16.msra.mxu0 0
    %410 = vmatprep.subr.bf16.mxu0 0
    %411 = vmatpush1.bf16.msra.mxu0 0
    %412 = vmatprep.subr.bf16.mxu0 0
    %413 = vmatpush1.bf16.msra.mxu0 0
    %414 = vmatprep.subr.bf16.mxu0 0
    %415 = vmatpush1.bf16.msra.mxu0 0
    %416 = vmatprep.subr.bf16.mxu0 0
    %417 = vmatpush1.bf16.msra.mxu0 0
    %418 = vmatprep.subr.bf16.mxu0 0
    %419 = vmatpush1.bf16.msra.mxu0 0
    %420 = vmatprep.subr.bf16.mxu0 0
    %421 = vmatpush1.bf16.msra.mxu0 0
    %422 = vmatprep.subr.bf16.mxu0 0
    %423 = vmatpush1.bf16.msra.mxu0 0
    %424 = vmatprep.subr.bf16.mxu0 0
    %425 = vmatpush1.bf16.msra.mxu0 0
    %426 = vmatprep.subr.bf16.mxu0 0
    %427 = vmatpush1.bf16.msra.mxu0 0
    %428 = vmatprep.mubr.bf16.mxu0 0
    %429 = vmatmul.mubr.bf16.gmra.mrb[0].mxu0 %v391
    %v430 = vpop.f32.mrb[0].mxu0
    %v431 = vadd.f32 0.0, %v430
    %v432 = vpop.f32.mrb[0].mxu0
    %v433 = vpop.f32.mrb[0].mxu0
    %v434 = vadd.f32 0.0, %v433
    %v435 = vpop.f32.mrb[0].mxu0
    %436 = vmatprep.mubr.bf16.mxu0 0
    %437 = vmatmul.mubr.bf16.gmra.mrb[0].mxu0 %v394
    %v438 = vpop.f32.mrb[0].mxu0
    %v439 = vadd.f32 0.0, %v438
    %v440 = vpop.f32.mrb[0].mxu0
    %v441 = vpop.f32.mrb[0].mxu0
    %v442 = vadd.f32 0.0, %v441
    %v443 = vpop.f32.mrb[0].mxu0
    %444 = vdwg.mxu0
    %447 = vrot.lane.b32.xlu0 %v431, 32
    %v448 = vpop.permute.xlu0 %447
    %449 = vrot.lane.b32.xlu0 %v434, 32
    %v450 = vpop.permute.xlu0 %449
    %v453 = vmul.f32 %v74, %v448
    %v454 = vmul.f32 %v75, %v450
    %457 = vrot.lane.b32.xlu0 %v453, 96
    %v458 = vpop.permute.xlu0 %457
    %459 = vrot.lane.b32.xlu0 %v454, 96
    %v460 = vpop.permute.xlu0 %459
    %v463 = vsel %vm93, %v458, 0.0
    %v464 = vsel %vm93, %v460, 0.0
    %v465 = vadd.f32 %v463, %v464
    %466 = vadd.xlane.f32.xlu0 %v465
    %v467 = vpop.xlane.xlu0 %466
    %v468 = vrot.slane %v467, 4
    %v469 = vadd.f32 %v467, %v468
    %v470 = vrot.slane %v469, 2
    %v471 = vadd.f32 %v469, %v470
    %v472 = vrot.slane %v471, 1
    %v473 = vadd.f32 %v471, %v472
    %s474 = vtos %v473
    %s475 = sadd.f32 %s354, %s474
    %478 = vrot.lane.b32.xlu0 %v439, 32
    %v479 = vpop.permute.xlu0 %478
    %480 = vrot.lane.b32.xlu0 %v442, 32
    %v481 = vpop.permute.xlu0 %480
    %v484 = vmul.f32 %v70, %v479
    %v485 = vmul.f32 %v71, %v481
    %488 = vrot.lane.b32.xlu0 %v484, 96
    %v489 = vpop.permute.xlu0 %488
    %490 = vrot.lane.b32.xlu0 %v485, 96
    %v491 = vpop.permute.xlu0 %490
    %v494 = vsel %vm93, %v489, 0.0
    %v495 = vsel %vm93, %v491, 0.0
    %v496 = vadd.f32 %v494, %v495
    %497 = vadd.xlane.f32.xlu0 %v496
    %v498 = vpop.xlane.xlu0 %497
    %v499 = vrot.slane %v498, 4
    %v500 = vadd.f32 %v498, %v499
    %v501 = vrot.slane %v500, 2
    %v502 = vadd.f32 %v500, %v501
    %v503 = vrot.slane %v502, 1
    %v504 = vadd.f32 %v502, %v503
    %s505 = vtos %v504
    %s506 = sadd.f32 %s385, %s505
    %507 = vrot.lane.b32.xlu0 %v78, 80
    %v508 = vpop.permute.xlu0 %507
    %509 = vrot.lane.b32.xlu0 %v79, 80
    %v510 = vpop.permute.xlu0 %509
    %v512 = vsel %vm93, %v508, 0
    %v515 = vsel %vm93, %v510, 0
    %517 = vmatprep.subr.bf16.mxu0 0
    %518 = vmatpush1.bf16.msra.mxu0 %v178
    %519 = vmatprep.subr.bf16.mxu0 0
    %520 = vmatpush1.bf16.msra.mxu0 0
    %521 = vmatprep.subr.bf16.mxu0 0
    %522 = vmatpush1.bf16.msra.mxu0 0
    %523 = vmatprep.subr.bf16.mxu0 0
    %524 = vmatpush1.bf16.msra.mxu0 0
    %525 = vmatprep.subr.bf16.mxu0 0
    %526 = vmatpush1.bf16.msra.mxu0 0
    %527 = vmatprep.subr.bf16.mxu0 0
    %528 = vmatpush1.bf16.msra.mxu0 0
    %529 = vmatprep.subr.bf16.mxu0 0
    %530 = vmatpush1.bf16.msra.mxu0 0
    %531 = vmatprep.subr.bf16.mxu0 0
    %532 = vmatpush1.bf16.msra.mxu0 0
    %533 = vmatprep.subr.bf16.mxu0 0
    %534 = vmatpush1.bf16.msra.mxu0 0
    %535 = vmatprep.subr.bf16.mxu0 0
    %536 = vmatpush1.bf16.msra.mxu0 0
    %537 = vmatprep.subr.bf16.mxu0 0
    %538 = vmatpush1.bf16.msra.mxu0 0
    %539 = vmatprep.subr.bf16.mxu0 0
    %540 = vmatpush1.bf16.msra.mxu0 0
    %541 = vmatprep.subr.bf16.mxu0 0
    %542 = vmatpush1.bf16.msra.mxu0 0
    %543 = vmatprep.subr.bf16.mxu0 0
    %544 = vmatpush1.bf16.msra.mxu0 0
    %545 = vmatprep.subr.bf16.mxu0 0
    %546 = vmatpush1.bf16.msra.mxu0 0
    %547 = vmatprep.subr.bf16.mxu0 0
    %548 = vmatpush1.bf16.msra.mxu0 0
    %549 = vmatprep.mubr.bf16.mxu0 0
    %550 = vmatmul.mubr.bf16.gmra.mrb[0].mxu0 %v512
    %v551 = vpop.f32.mrb[0].mxu0
    %v552 = vadd.f32 0.0, %v551
    %v553 = vpop.f32.mrb[0].mxu0
    %v554 = vpop.f32.mrb[0].mxu0
    %v555 = vadd.f32 0.0, %v554
    %v556 = vpop.f32.mrb[0].mxu0
    %557 = vmatprep.mubr.bf16.mxu0 0
    %558 = vmatmul.mubr.bf16.gmra.mrb[0].mxu0 %v515
    %v559 = vpop.f32.mrb[0].mxu0
    %v560 = vadd.f32 0.0, %v559
    %v561 = vpop.f32.mrb[0].mxu0
    %v562 = vpop.f32.mrb[0].mxu0
    %v563 = vadd.f32 0.0, %v562
    %v564 = vpop.f32.mrb[0].mxu0
    %565 = vdwg.mxu0
    %568 = vrot.lane.b32.xlu0 %v552, 48
    %v569 = vpop.permute.xlu0 %568
    %570 = vrot.lane.b32.xlu0 %v555, 48
    %v571 = vpop.permute.xlu0 %570
    %v574 = vmul.f32 %v74, %v569
    %v575 = vmul.f32 %v75, %v571
    %578 = vrot.lane.b32.xlu0 %v574, 80
    %v579 = vpop.permute.xlu0 %578
    %580 = vrot.lane.b32.xlu0 %v575, 80
    %v581 = vpop.permute.xlu0 %580
    %v584 = vsel %vm93, %v579, 0.0
    %v585 = vsel %vm93, %v581, 0.0
    %v586 = vadd.f32 %v584, %v585
    %587 = vadd.xlane.f32.xlu0 %v586
    %v588 = vpop.xlane.xlu0 %587
    %v589 = vrot.slane %v588, 4
    %v590 = vadd.f32 %v588, %v589
    %v591 = vrot.slane %v590, 2
    %v592 = vadd.f32 %v590, %v591
    %v593 = vrot.slane %v592, 1
    %v594 = vadd.f32 %v592, %v593
    %s595 = vtos %v594
    %s596 = sadd.f32 %s475, %s595
    %599 = vrot.lane.b32.xlu0 %v560, 48
    %v600 = vpop.permute.xlu0 %599
    %601 = vrot.lane.b32.xlu0 %v563, 48
    %v602 = vpop.permute.xlu0 %601
    %v605 = vmul.f32 %v70, %v600
    %v606 = vmul.f32 %v71, %v602
    %609 = vrot.lane.b32.xlu0 %v605, 80
    %v610 = vpop.permute.xlu0 %609
    %611 = vrot.lane.b32.xlu0 %v606, 80
    %v612 = vpop.permute.xlu0 %611
    %v615 = vsel %vm93, %v610, 0.0
    %v616 = vsel %vm93, %v612, 0.0
    %v617 = vadd.f32 %v615, %v616
    %618 = vadd.xlane.f32.xlu0 %v617
    %v619 = vpop.xlane.xlu0 %618
    %v620 = vrot.slane %v619, 4
    %v621 = vadd.f32 %v619, %v620
    %v622 = vrot.slane %v621, 2
    %v623 = vadd.f32 %v621, %v622
    %v624 = vrot.slane %v623, 1
    %v625 = vadd.f32 %v623, %v624
    %s626 = vtos %v625
    %s627 = sadd.f32 %s506, %s626
    %v628 = vmul.f32 %v74, %v74
    %v629 = vmul.f32 %v75, %v75
    %v630 = vsel %vm83, %v628, 0.0
    %v631 = vsel %vm83, %v629, 0.0
    %v632 = vadd.f32 %v630, %v631
    %633 = vadd.xlane.f32.xlu0 %v632
    %v634 = vpop.xlane.xlu0 %633
    %v635 = vrot.slane %v634, 4
    %v636 = vadd.f32 %v634, %v635
    %v637 = vrot.slane %v636, 2
    %v638 = vadd.f32 %v636, %v637
    %v639 = vrot.slane %v638, 1
    %v640 = vadd.f32 %v638, %v639
    %s641 = vtos %v640
    %v642 = vmul.f32 %v70, %v70
    %v643 = vmul.f32 %v71, %v71
    %v644 = vsel %vm83, %v642, 0.0
    %v645 = vsel %vm83, %v643, 0.0
    %v646 = vadd.f32 %v644, %v645
    %647 = vadd.xlane.f32.xlu0 %v646
    %v648 = vpop.xlane.xlu0 %647
    %v649 = vrot.slane %v648, 4
    %v650 = vadd.f32 %v648, %v649
    %v651 = vrot.slane %v650, 2
    %v652 = vadd.f32 %v650, %v651
    %v653 = vrot.slane %v652, 1
    %v654 = vadd.f32 %v652, %v653
    %s655 = vtos %v654
    %s656 = smul.f32 %s151, 16.0
    %s657 = smul.f32 %s596, 16.0
    %s658 = sadd.f32 %s656, %s657
    %s659 = smul.f32 %s641, 256.0
    %s660 = sadd.f32 %s658, %s659
    %s661 = smul.f32 %s173, 16.0
    %s662 = smul.f32 %s627, 16.0
    %s663 = sadd.f32 %s661, %s662
    %s664 = smul.f32 %s655, 256.0
    %s665 = sadd.f32 %s663, %s664
    %vm666 = vcmp.eq.s32.totalorder %v65, 0
    %vm667 = vcmp.eq.s32.totalorder %v65, 1
    %v668 = vstv %s665
    %v669 = vsel %vm667, %v668, 0.0
    %v670 = vstv %s660
    %v671 = vsel %vm666, %v670, %v669
    %v672 = vpack.c.bf16 %v77, %v76
    %v673 = vpack.c.bf16 %v73, %v72
    %675 = vrot.lane.b32.xlu0 %v673, 64
    %v676 = vpop.permute.xlu0 %675
    %v679 = vsel %vm83, %v672, %v676
    %681 = vmatprep.subr.bf16.mxu0 0
    %682 = vmatpush1.bf16.msra.mxu0 %v679
    %683 = vmatprep.subr.bf16.mxu0 0
    %684 = vmatpush1.bf16.msra.mxu0 0
    %685 = vmatprep.subr.bf16.mxu0 0
    %686 = vmatpush1.bf16.msra.mxu0 0
    %687 = vmatprep.subr.bf16.mxu0 0
    %688 = vmatpush1.bf16.msra.mxu0 0
    %689 = vmatprep.subr.bf16.mxu0 0
    %690 = vmatpush1.bf16.msra.mxu0 0
    %691 = vmatprep.subr.bf16.mxu0 0
    %692 = vmatpush1.bf16.msra.mxu0 0
    %693 = vmatprep.subr.bf16.mxu0 0
    %694 = vmatpush1.bf16.msra.mxu0 0
    %695 = vmatprep.subr.bf16.mxu0 0
    %696 = vmatpush1.bf16.msra.mxu0 0
    %697 = vmatprep.subr.bf16.mxu0 0
    %698 = vmatpush1.bf16.msra.mxu0 0
    %699 = vmatprep.subr.bf16.mxu0 0
    %700 = vmatpush1.bf16.msra.mxu0 0
    %701 = vmatprep.subr.bf16.mxu0 0
    %702 = vmatpush1.bf16.msra.mxu0 0
    %703 = vmatprep.subr.bf16.mxu0 0
    %704 = vmatpush1.bf16.msra.mxu0 0
    %705 = vmatprep.subr.bf16.mxu0 0
    %706 = vmatpush1.bf16.msra.mxu0 0
    %707 = vmatprep.subr.bf16.mxu0 0
    %708 = vmatpush1.bf16.msra.mxu0 0
    %709 = vmatprep.subr.bf16.mxu0 0
    %710 = vmatpush1.bf16.msra.mxu0 0
    %711 = vmatprep.subr.bf16.mxu0 0
    %712 = vmatpush1.bf16.msra.mxu0 0
    %713 = vmatprep.mubr.bf16.mxu0 0
    %714 = vmatmul.mubr.bf16.gmra.mrb[0].mxu0 %v95
    %v715 = vpop.f32.mrb[0].mxu0
    %v716 = vadd.f32 0.0, %v715
    %v717 = vpop.f32.mrb[0].mxu0
    %v718 = vpop.f32.mrb[0].mxu0
    %v719 = vadd.f32 0.0, %v718
    %v720 = vpop.f32.mrb[0].mxu0
    %721 = vdwg.mxu0
    %v722 = vmul.f32 %v76, %v716
    %v723 = vmul.f32 %v77, %v719
    %v724 = vsel %vm83, %v722, 0.0
    %v725 = vsel %vm83, %v723, 0.0
    %v726 = vadd.f32 %v724, %v725
    %727 = vadd.xlane.f32.xlu0 %v726
    %v728 = vpop.xlane.xlu0 %727
    %v729 = vrot.slane %v728, 4
    %v730 = vadd.f32 %v728, %v729
    %v731 = vrot.slane %v730, 2
    %v732 = vadd.f32 %v730, %v731
    %v733 = vrot.slane %v732, 1
    %v734 = vadd.f32 %v732, %v733
    %s735 = vtos %v734
    %738 = vrot.lane.b32.xlu0 %v716, 64
    %v739 = vpop.permute.xlu0 %738
    %740 = vrot.lane.b32.xlu0 %v719, 64
    %v741 = vpop.permute.xlu0 %740
    %v744 = vmul.f32 %v72, %v739
    %v745 = vmul.f32 %v73, %v741
    %v746 = vsel %vm83, %v744, 0.0
    %v747 = vsel %vm83, %v745, 0.0
    %v748 = vadd.f32 %v746, %v747
    %749 = vadd.xlane.f32.xlu0 %v748
    %v750 = vpop.xlane.xlu0 %749
    %v751 = vrot.slane %v750, 4
    %v752 = vadd.f32 %v750, %v751
    %v753 = vrot.slane %v752, 2
    %v754 = vadd.f32 %v752, %v753
    %v755 = vrot.slane %v754, 1
    %v756 = vadd.f32 %v754, %v755
    %s757 = vtos %v756
    %v758 = vsel %vm93, %v672, 0
    %v761 = vsel %vm93, %v673, 0
    %763 = vmatprep.subr.bf16.mxu0 0
    %764 = vmatpush1.bf16.msra.mxu0 %v178
    %765 = vmatprep.subr.bf16.mxu0 0
    %766 = vmatpush1.bf16.msra.mxu0 0
    %767 = vmatprep.subr.bf16.mxu0 0
    %768 = vmatpush1.bf16.msra.mxu0 0
    %769 = vmatprep.subr.bf16.mxu0 0
    %770 = vmatpush1.bf16.msra.mxu0 0
    %771 = vmatprep.subr.bf16.mxu0 0
    %772 = vmatpush1.bf16.msra.mxu0 0
    %773 = vmatprep.subr.bf16.mxu0 0
    %774 = vmatpush1.bf16.msra.mxu0 0
    %775 = vmatprep.subr.bf16.mxu0 0
    %776 = vmatpush1.bf16.msra.mxu0 0
    %777 = vmatprep.subr.bf16.mxu0 0
    %778 = vmatpush1.bf16.msra.mxu0 0
    %779 = vmatprep.subr.bf16.mxu0 0
    %780 = vmatpush1.bf16.msra.mxu0 0
    %781 = vmatprep.subr.bf16.mxu0 0
    %782 = vmatpush1.bf16.msra.mxu0 0
    %783 = vmatprep.subr.bf16.mxu0 0
    %784 = vmatpush1.bf16.msra.mxu0 0
    %785 = vmatprep.subr.bf16.mxu0 0
    %786 = vmatpush1.bf16.msra.mxu0 0
    %787 = vmatprep.subr.bf16.mxu0 0
    %788 = vmatpush1.bf16.msra.mxu0 0
    %789 = vmatprep.subr.bf16.mxu0 0
    %790 = vmatpush1.bf16.msra.mxu0 0
    %791 = vmatprep.subr.bf16.mxu0 0
    %792 = vmatpush1.bf16.msra.mxu0 0
    %793 = vmatprep.subr.bf16.mxu0 0
    %794 = vmatpush1.bf16.msra.mxu0 0
    %795 = vmatprep.mubr.bf16.mxu0 0
    %796 = vmatmul.mubr.bf16.gmra.mrb[0].mxu0 %v758
    %v797 = vpop.f32.mrb[0].mxu0
    %v798 = vadd.f32 0.0, %v797
    %v799 = vpop.f32.mrb[0].mxu0
    %v800 = vpop.f32.mrb[0].mxu0
    %v801 = vadd.f32 0.0, %v800
    %v802 = vpop.f32.mrb[0].mxu0
    %803 = vmatprep.mubr.bf16.mxu0 0
    %804 = vmatmul.mubr.bf16.gmra.mrb[0].mxu0 %v761
    %v805 = vpop.f32.mrb[0].mxu0
    %v806 = vadd.f32 0.0, %v805
    %v807 = vpop.f32.mrb[0].mxu0
    %v808 = vpop.f32.mrb[0].mxu0
    %v809 = vadd.f32 0.0, %v808
    %v810 = vpop.f32.mrb[0].mxu0
    %811 = vdwg.mxu0
    %v812 = vmul.f32 %v76, %v798
    %v813 = vmul.f32 %v77, %v801
    %v814 = vsel %vm93, %v812, 0.0
    %v815 = vsel %vm93, %v813, 0.0
    %v816 = vadd.f32 %v814, %v815
    %817 = vadd.xlane.f32.xlu0 %v816
    %v818 = vpop.xlane.xlu0 %817
    %v819 = vrot.slane %v818, 4
    %v820 = vadd.f32 %v818, %v819
    %v821 = vrot.slane %v820, 2
    %v822 = vadd.f32 %v820, %v821
    %v823 = vrot.slane %v822, 1
    %v824 = vadd.f32 %v822, %v823
    %s825 = vtos %v824
    %s826 = sadd.f32 %s825, 0.0
    %v827 = vmul.f32 %v72, %v806
    %v828 = vmul.f32 %v73, %v809
    %v829 = vsel %vm93, %v827, 0.0
    %v830 = vsel %vm93, %v828, 0.0
    %v831 = vadd.f32 %v829, %v830
    %832 = vadd.xlane.f32.xlu0 %v831
    %v833 = vpop.xlane.xlu0 %832
    %v834 = vrot.slane %v833, 4
    %v835 = vadd.f32 %v833, %v834
    %v836 = vrot.slane %v835, 2
    %v837 = vadd.f32 %v835, %v836
    %v838 = vrot.slane %v837, 1
    %v839 = vadd.f32 %v837, %v838
    %s840 = vtos %v839
    %s841 = sadd.f32 %s840, 0.0
    %843 = vrot.lane.b32.xlu0 %v672, 112
    %v844 = vpop.permute.xlu0 %843
    %845 = vrot.lane.b32.xlu0 %v673, 112
    %v846 = vpop.permute.xlu0 %845
    %v848 = vsel %vm93, %v844, 0
    %v851 = vsel %vm93, %v846, 0
    %853 = vmatprep.subr.bf16.mxu0 0
    %854 = vmatpush1.bf16.msra.mxu0 %v178
    %855 = vmatprep.subr.bf16.mxu0 0
    %856 = vmatpush1.bf16.msra.mxu0 0
    %857 = vmatprep.subr.bf16.mxu0 0
    %858 = vmatpush1.bf16.msra.mxu0 0
    %859 = vmatprep.subr.bf16.mxu0 0
    %860 = vmatpush1.bf16.msra.mxu0 0
    %861 = vmatprep.subr.bf16.mxu0 0
    %862 = vmatpush1.bf16.msra.mxu0 0
    %863 = vmatprep.subr.bf16.mxu0 0
    %864 = vmatpush1.bf16.msra.mxu0 0
    %865 = vmatprep.subr.bf16.mxu0 0
    %866 = vmatpush1.bf16.msra.mxu0 0
    %867 = vmatprep.subr.bf16.mxu0 0
    %868 = vmatpush1.bf16.msra.mxu0 0
    %869 = vmatprep.subr.bf16.mxu0 0
    %870 = vmatpush1.bf16.msra.mxu0 0
    %871 = vmatprep.subr.bf16.mxu0 0
    %872 = vmatpush1.bf16.msra.mxu0 0
    %873 = vmatprep.subr.bf16.mxu0 0
    %874 = vmatpush1.bf16.msra.mxu0 0
    %875 = vmatprep.subr.bf16.mxu0 0
    %876 = vmatpush1.bf16.msra.mxu0 0
    %877 = vmatprep.subr.bf16.mxu0 0
    %878 = vmatpush1.bf16.msra.mxu0 0
    %879 = vmatprep.subr.bf16.mxu0 0
    %880 = vmatpush1.bf16.msra.mxu0 0
    %881 = vmatprep.subr.bf16.mxu0 0
    %882 = vmatpush1.bf16.msra.mxu0 0
    %883 = vmatprep.subr.bf16.mxu0 0
    %884 = vmatpush1.bf16.msra.mxu0 0
    %885 = vmatprep.mubr.bf16.mxu0 0
    %886 = vmatmul.mubr.bf16.gmra.mrb[0].mxu0 %v848
    %v887 = vpop.f32.mrb[0].mxu0
    %v888 = vadd.f32 0.0, %v887
    %v889 = vpop.f32.mrb[0].mxu0
    %v890 = vpop.f32.mrb[0].mxu0
    %v891 = vadd.f32 0.0, %v890
    %v892 = vpop.f32.mrb[0].mxu0
    %893 = vmatprep.mubr.bf16.mxu0 0
    %894 = vmatmul.mubr.bf16.gmra.mrb[0].mxu0 %v851
    %v895 = vpop.f32.mrb[0].mxu0
    %v896 = vadd.f32 0.0, %v895
    %v897 = vpop.f32.mrb[0].mxu0
    %v898 = vpop.f32.mrb[0].mxu0
    %v899 = vadd.f32 0.0, %v898
    %v900 = vpop.f32.mrb[0].mxu0
    %901 = vdwg.mxu0
    %904 = vrot.lane.b32.xlu0 %v888, 16
    %v905 = vpop.permute.xlu0 %904
    %906 = vrot.lane.b32.xlu0 %v891, 16
    %v907 = vpop.permute.xlu0 %906
    %v910 = vmul.f32 %v76, %v905
    %v911 = vmul.f32 %v77, %v907
    %914 = vrot.lane.b32.xlu0 %v910, 112
    %v915 = vpop.permute.xlu0 %914
    %916 = vrot.lane.b32.xlu0 %v911, 112
    %v917 = vpop.permute.xlu0 %916
    %v920 = vsel %vm93, %v915, 0.0
    %v921 = vsel %vm93, %v917, 0.0
    %v922 = vadd.f32 %v920, %v921
    %923 = vadd.xlane.f32.xlu0 %v922
    %v924 = vpop.xlane.xlu0 %923
    %v925 = vrot.slane %v924, 4
    %v926 = vadd.f32 %v924, %v925
    %v927 = vrot.slane %v926, 2
    %v928 = vadd.f32 %v926, %v927
    %v929 = vrot.slane %v928, 1
    %v930 = vadd.f32 %v928, %v929
    %s931 = vtos %v930
    %s932 = sadd.f32 %s826, %s931
    %935 = vrot.lane.b32.xlu0 %v896, 16
    %v936 = vpop.permute.xlu0 %935
    %937 = vrot.lane.b32.xlu0 %v899, 16
    %v938 = vpop.permute.xlu0 %937
    %v941 = vmul.f32 %v72, %v936
    %v942 = vmul.f32 %v73, %v938
    %945 = vrot.lane.b32.xlu0 %v941, 112
    %v946 = vpop.permute.xlu0 %945
    %947 = vrot.lane.b32.xlu0 %v942, 112
    %v948 = vpop.permute.xlu0 %947
    %v951 = vsel %vm93, %v946, 0.0
    %v952 = vsel %vm93, %v948, 0.0
    %v953 = vadd.f32 %v951, %v952
    %954 = vadd.xlane.f32.xlu0 %v953
    %v955 = vpop.xlane.xlu0 %954
    %v956 = vrot.slane %v955, 4
    %v957 = vadd.f32 %v955, %v956
    %v958 = vrot.slane %v957, 2
    %v959 = vadd.f32 %v957, %v958
    %v960 = vrot.slane %v959, 1
    %v961 = vadd.f32 %v959, %v960
    %s962 = vtos %v961
    %s963 = sadd.f32 %s841, %s962
    %964 = vrot.lane.b32.xlu0 %v672, 96
    %v965 = vpop.permute.xlu0 %964
    %966 = vrot.lane.b32.xlu0 %v673, 96
    %v967 = vpop.permute.xlu0 %966
    %v969 = vsel %vm93, %v965, 0
    %v972 = vsel %vm93, %v967, 0
    %974 = vmatprep.subr.bf16.mxu0 0
    %975 = vmatpush1.bf16.msra.mxu0 %v178
    %976 = vmatprep.subr.bf16.mxu0 0
    %977 = vmatpush1.bf16.msra.mxu0 0
    %978 = vmatprep.subr.bf16.mxu0 0
    %979 = vmatpush1.bf16.msra.mxu0 0
    %980 = vmatprep.subr.bf16.mxu0 0
    %981 = vmatpush1.bf16.msra.mxu0 0
    %982 = vmatprep.subr.bf16.mxu0 0
    %983 = vmatpush1.bf16.msra.mxu0 0
    %984 = vmatprep.subr.bf16.mxu0 0
    %985 = vmatpush1.bf16.msra.mxu0 0
    %986 = vmatprep.subr.bf16.mxu0 0
    %987 = vmatpush1.bf16.msra.mxu0 0
    %988 = vmatprep.subr.bf16.mxu0 0
    %989 = vmatpush1.bf16.msra.mxu0 0
    %990 = vmatprep.subr.bf16.mxu0 0
    %991 = vmatpush1.bf16.msra.mxu0 0
    %992 = vmatprep.subr.bf16.mxu0 0
    %993 = vmatpush1.bf16.msra.mxu0 0
    %994 = vmatprep.subr.bf16.mxu0 0
    %995 = vmatpush1.bf16.msra.mxu0 0
    %996 = vmatprep.subr.bf16.mxu0 0
    %997 = vmatpush1.bf16.msra.mxu0 0
    %998 = vmatprep.subr.bf16.mxu0 0
    %999 = vmatpush1.bf16.msra.mxu0 0
    %1000 = vmatprep.subr.bf16.mxu0 0
    %1001 = vmatpush1.bf16.msra.mxu0 0
    %1002 = vmatprep.subr.bf16.mxu0 0
    %1003 = vmatpush1.bf16.msra.mxu0 0
    %1004 = vmatprep.subr.bf16.mxu0 0
    %1005 = vmatpush1.bf16.msra.mxu0 0
    %1006 = vmatprep.mubr.bf16.mxu0 0
    %1007 = vmatmul.mubr.bf16.gmra.mrb[0].mxu0 %v969
    %v1008 = vpop.f32.mrb[0].mxu0
    %v1009 = vadd.f32 0.0, %v1008
    %v1010 = vpop.f32.mrb[0].mxu0
    %v1011 = vpop.f32.mrb[0].mxu0
    %v1012 = vadd.f32 0.0, %v1011
    %v1013 = vpop.f32.mrb[0].mxu0
    %1014 = vmatprep.mubr.bf16.mxu0 0
    %1015 = vmatmul.mubr.bf16.gmra.mrb[0].mxu0 %v972
    %v1016 = vpop.f32.mrb[0].mxu0
    %v1017 = vadd.f32 0.0, %v1016
    %v1018 = vpop.f32.mrb[0].mxu0
    %v1019 = vpop.f32.mrb[0].mxu0
    %v1020 = vadd.f32 0.0, %v1019
    %v1021 = vpop.f32.mrb[0].mxu0
    %1022 = vdwg.mxu0
    %1025 = vrot.lane.b32.xlu0 %v1009, 32
    %v1026 = vpop.permute.xlu0 %1025
    %1027 = vrot.lane.b32.xlu0 %v1012, 32
    %v1028 = vpop.permute.xlu0 %1027
    %v1031 = vmul.f32 %v76, %v1026
    %v1032 = vmul.f32 %v77, %v1028
    %1035 = vrot.lane.b32.xlu0 %v1031, 96
    %v1036 = vpop.permute.xlu0 %1035
    %1037 = vrot.lane.b32.xlu0 %v1032, 96
    %v1038 = vpop.permute.xlu0 %1037
    %v1041 = vsel %vm93, %v1036, 0.0
    %v1042 = vsel %vm93, %v1038, 0.0
    %v1043 = vadd.f32 %v1041, %v1042
    %1044 = vadd.xlane.f32.xlu0 %v1043
    %v1045 = vpop.xlane.xlu0 %1044
    %v1046 = vrot.slane %v1045, 4
    %v1047 = vadd.f32 %v1045, %v1046
    %v1048 = vrot.slane %v1047, 2
    %v1049 = vadd.f32 %v1047, %v1048
    %v1050 = vrot.slane %v1049, 1
    %v1051 = vadd.f32 %v1049, %v1050
    %s1052 = vtos %v1051
    %s1053 = sadd.f32 %s932, %s1052
    %1056 = vrot.lane.b32.xlu0 %v1017, 32
    %v1057 = vpop.permute.xlu0 %1056
    %1058 = vrot.lane.b32.xlu0 %v1020, 32
    %v1059 = vpop.permute.xlu0 %1058
    %v1062 = vmul.f32 %v72, %v1057
    %v1063 = vmul.f32 %v73, %v1059
    %1066 = vrot.lane.b32.xlu0 %v1062, 96
    %v1067 = vpop.permute.xlu0 %1066
    %1068 = vrot.lane.b32.xlu0 %v1063, 96
    %v1069 = vpop.permute.xlu0 %1068
    %v1072 = vsel %vm93, %v1067, 0.0
    %v1073 = vsel %vm93, %v1069, 0.0
    %v1074 = vadd.f32 %v1072, %v1073
    %1075 = vadd.xlane.f32.xlu0 %v1074
    %v1076 = vpop.xlane.xlu0 %1075
    %v1077 = vrot.slane %v1076, 4
    %v1078 = vadd.f32 %v1076, %v1077
    %v1079 = vrot.slane %v1078, 2
    %v1080 = vadd.f32 %v1078, %v1079
    %v1081 = vrot.slane %v1080, 1
    %v1082 = vadd.f32 %v1080, %v1081
    %s1083 = vtos %v1082
    %s1084 = sadd.f32 %s963, %s1083
    %1085 = vrot.lane.b32.xlu0 %v672, 80
    %v1086 = vpop.permute.xlu0 %1085
    %1087 = vrot.lane.b32.xlu0 %v673, 80
    %v1088 = vpop.permute.xlu0 %1087
    %v1090 = vsel %vm93, %v1086, 0
    %v1093 = vsel %vm93, %v1088, 0
    %1095 = vmatprep.subr.bf16.mxu0 0
    %1096 = vmatpush1.bf16.msra.mxu0 %v178
    %1097 = vmatprep.subr.bf16.mxu0 0
    %1098 = vmatpush1.bf16.msra.mxu0 0
    %1099 = vmatprep.subr.bf16.mxu0 0
    %1100 = vmatpush1.bf16.msra.mxu0 0
    %1101 = vmatprep.subr.bf16.mxu0 0
    %1102 = vmatpush1.bf16.msra.mxu0 0
    %1103 = vmatprep.subr.bf16.mxu0 0
    %1104 = vmatpush1.bf16.msra.mxu0 0
    %1105 = vmatprep.subr.bf16.mxu0 0
    %1106 = vmatpush1.bf16.msra.mxu0 0
    %1107 = vmatprep.subr.bf16.mxu0 0
    %1108 = vmatpush1.bf16.msra.mxu0 0
    %1109 = vmatprep.subr.bf16.mxu0 0
    %1110 = vmatpush1.bf16.msra.mxu0 0
    %1111 = vmatprep.subr.bf16.mxu0 0
    %1112 = vmatpush1.bf16.msra.mxu0 0
    %1113 = vmatprep.subr.bf16.mxu0 0
    %1114 = vmatpush1.bf16.msra.mxu0 0
    %1115 = vmatprep.subr.bf16.mxu0 0
    %1116 = vmatpush1.bf16.msra.mxu0 0
    %1117 = vmatprep.subr.bf16.mxu0 0
    %1118 = vmatpush1.bf16.msra.mxu0 0
    %1119 = vmatprep.subr.bf16.mxu0 0
    %1120 = vmatpush1.bf16.msra.mxu0 0
    %1121 = vmatprep.subr.bf16.mxu0 0
    %1122 = vmatpush1.bf16.msra.mxu0 0
    %1123 = vmatprep.subr.bf16.mxu0 0
    %1124 = vmatpush1.bf16.msra.mxu0 0
    %1125 = vmatprep.subr.bf16.mxu0 0
    %1126 = vmatpush1.bf16.msra.mxu0 0
    %1127 = vmatprep.mubr.bf16.mxu0 0
    %1128 = vmatmul.mubr.bf16.gmra.mrb[0].mxu0 %v1090
    %v1129 = vpop.f32.mrb[0].mxu0
    %v1130 = vadd.f32 0.0, %v1129
    %v1131 = vpop.f32.mrb[0].mxu0
    %v1132 = vpop.f32.mrb[0].mxu0
    %v1133 = vadd.f32 0.0, %v1132
    %v1134 = vpop.f32.mrb[0].mxu0
    %1135 = vmatprep.mubr.bf16.mxu0 0
    %1136 = vmatmul.mubr.bf16.gmra.mrb[0].mxu0 %v1093
    %v1137 = vpop.f32.mrb[0].mxu0
    %v1138 = vadd.f32 0.0, %v1137
    %v1139 = vpop.f32.mrb[0].mxu0
    %v1140 = vpop.f32.mrb[0].mxu0
    %v1141 = vadd.f32 0.0, %v1140
    %v1142 = vpop.f32.mrb[0].mxu0
    %1143 = vdwg.mxu0
    %1146 = vrot.lane.b32.xlu0 %v1130, 48
    %v1147 = vpop.permute.xlu0 %1146
    %1148 = vrot.lane.b32.xlu0 %v1133, 48
    %v1149 = vpop.permute.xlu0 %1148
    %v1152 = vmul.f32 %v76, %v1147
    %v1153 = vmul.f32 %v77, %v1149
    %1156 = vrot.lane.b32.xlu0 %v1152, 80
    %v1157 = vpop.permute.xlu0 %1156
    %1158 = vrot.lane.b32.xlu0 %v1153, 80
    %v1159 = vpop.permute.xlu0 %1158
    %v1162 = vsel %vm93, %v1157, 0.0
    %v1163 = vsel %vm93, %v1159, 0.0
    %v1164 = vadd.f32 %v1162, %v1163
    %1165 = vadd.xlane.f32.xlu0 %v1164
    %v1166 = vpop.xlane.xlu0 %1165
    %v1167 = vrot.slane %v1166, 4
    %v1168 = vadd.f32 %v1166, %v1167
    %v1169 = vrot.slane %v1168, 2
    %v1170 = vadd.f32 %v1168, %v1169
    %v1171 = vrot.slane %v1170, 1
    %v1172 = vadd.f32 %v1170, %v1171
    %s1173 = vtos %v1172
    %s1174 = sadd.f32 %s1053, %s1173
    %1177 = vrot.lane.b32.xlu0 %v1138, 48
    %v1178 = vpop.permute.xlu0 %1177
    %1179 = vrot.lane.b32.xlu0 %v1141, 48
    %v1180 = vpop.permute.xlu0 %1179
    %v1183 = vmul.f32 %v72, %v1178
    %v1184 = vmul.f32 %v73, %v1180
    %1187 = vrot.lane.b32.xlu0 %v1183, 80
    %v1188 = vpop.permute.xlu0 %1187
    %1189 = vrot.lane.b32.xlu0 %v1184, 80
    %v1190 = vpop.permute.xlu0 %1189
    %v1193 = vsel %vm93, %v1188, 0.0
    %v1194 = vsel %vm93, %v1190, 0.0
    %v1195 = vadd.f32 %v1193, %v1194
    %1196 = vadd.xlane.f32.xlu0 %v1195
    %v1197 = vpop.xlane.xlu0 %1196
    %v1198 = vrot.slane %v1197, 4
    %v1199 = vadd.f32 %v1197, %v1198
    %v1200 = vrot.slane %v1199, 2
    %v1201 = vadd.f32 %v1199, %v1200
    %v1202 = vrot.slane %v1201, 1
    %v1203 = vadd.f32 %v1201, %v1202
    %s1204 = vtos %v1203
    %s1205 = sadd.f32 %s1084, %s1204
    %v1206 = vmul.f32 %v76, %v76
    %v1207 = vmul.f32 %v77, %v77
    %v1208 = vsel %vm83, %v1206, 0.0
    %v1209 = vsel %vm83, %v1207, 0.0
    %v1210 = vadd.f32 %v1208, %v1209
    %1211 = vadd.xlane.f32.xlu0 %v1210
    %v1212 = vpop.xlane.xlu0 %1211
    %v1213 = vrot.slane %v1212, 4
    %v1214 = vadd.f32 %v1212, %v1213
    %v1215 = vrot.slane %v1214, 2
    %v1216 = vadd.f32 %v1214, %v1215
    %v1217 = vrot.slane %v1216, 1
    %v1218 = vadd.f32 %v1216, %v1217
    %s1219 = vtos %v1218
    %v1220 = vmul.f32 %v72, %v72
    %v1221 = vmul.f32 %v73, %v73
    %v1222 = vsel %vm83, %v1220, 0.0
    %v1223 = vsel %vm83, %v1221, 0.0
    %v1224 = vadd.f32 %v1222, %v1223
    %1225 = vadd.xlane.f32.xlu0 %v1224
    %v1226 = vpop.xlane.xlu0 %1225
    %v1227 = vrot.slane %v1226, 4
    %v1228 = vadd.f32 %v1226, %v1227
    %v1229 = vrot.slane %v1228, 2
    %v1230 = vadd.f32 %v1228, %v1229
    %v1231 = vrot.slane %v1230, 1
    %v1232 = vadd.f32 %v1230, %v1231
    %s1233 = vtos %v1232
    %s1234 = smul.f32 %s735, 16.0
    %s1235 = smul.f32 %s1174, 16.0
    %s1236 = sadd.f32 %s1234, %s1235
    %s1237 = smul.f32 %s1219, 256.0
    %s1238 = sadd.f32 %s1236, %s1237
    %s1239 = smul.f32 %s757, 16.0
    %s1240 = smul.f32 %s1205, 16.0
    %s1241 = sadd.f32 %s1239, %s1240
    %s1242 = smul.f32 %s1233, 256.0
    %s1243 = sadd.f32 %s1241, %s1242
    %v1244 = vstv %s1243
    %v1245 = vsel %vm667, %v1244, 0.0
    %v1246 = vstv %s1238
    %v1247 = vsel %vm666, %v1246, %v1245
    %vm1248 = vcmask 1040384
    %v1249 = vsel %vm1248, %v671, %v1247
    %1250 = vst [vmem:[#allocation8] sm:$0x3] %v1249
    // Predicated region
    $region30: #{tpu_custom_call.1} parent=1 // pred_check
      _
    $region31: #{tpu_custom_call.1} parent=1 // pred_check_branch
      %1252 = sbr.rel (0) target = $region33
    $region32: #{tpu_custom_call.1} parent=1 // pred_region
      %s1254 = ssub.s32 32, 32
      %1255 = vsyncadd [#allocation4], %s1254
      %s1257 = sshll.u32 [#allocation8], 4
      %s1258 = int_to_ptr.vmem [resolvable:$true] %s1257
      %1260 = dma.vmem_to_hbm [thread:$0]  %s1258, 32, %s4, [#allocation4]
    $region33: #{tpu_custom_call.1} parent=1 // pred_fallthru
      _
    // Predicated region
    $region34: #{tpu_custom_call.1} parent=1 // pred_check
      _
    $region35: #{tpu_custom_call.1} parent=1 // pred_check_branch
      %1262 = sbr.rel (0) target = $region37
    $region36: #{tpu_custom_call.1} parent=1 // pred_region
      %1263 = dma.done [#allocation4], 32
    $region37: #{tpu_custom_call.1} parent=1 // pred_fallthru
      _
    %1264 = vsyncpa [#allocation3], 1
    %1265 = vsyncpa [#allocation6], 1
    %1266 = vsyncpa [#allocation4], 1

</llo_original>
